<compile_context>
chip_gen: v6e
topology: v6e:2x2x1
jax: 0.10.0
libtpu: 0.0.40
codegen_flags: <defaults>
</compile_context>

<pallas_src>
import functools

import jax
import jax.numpy as jnp
from jax import lax
from jax.experimental import pallas as pl
from jax.experimental.pallas import tpu as pltpu


def _round_up(v, m):
    return (v + m - 1) // m * m


def _lstm_kernel(x_ref, wih_ref, b_ref, whh_ref, fcw_ref, fcb_ref, out_ref,
                 gz_sc, h_sc, c_sc, *, B_p, Hp, Tblk, T, T_pad):
    """One grid step processes Tblk timesteps.

    x_ref   : (Tblk*B_p, D)    bf16  streamed chunk of time-major input rows
    wih_ref : (D, 4*Hp)        bf16  input->gate weights (gate order i, f, o, g)
    b_ref   : (1, 4*Hp)        f32   b_ih + b_hh (reordered, lane-padded)
    whh_ref : (Hp, 4*Hp)       bf16  hidden->gate weights
    fcw_ref : (Hp, Op)         bf16  final Linear weight (padded)
    fcb_ref : (1, Op)          f32   final Linear bias (padded)
    out_ref : (B_p, Op)        f32   resident output block, written on last chunk
    gz_sc   : (Tblk*B_p, 4*Hp) f32   per-chunk hoisted input projection
    h_sc/c_sc: (B_p, Hp)       f32   recurrent state, persists across grid steps
    """
    tb = pl.program_id(0)

    @pl.when(tb == 0)
    def _init():
        h_sc[...] = jnp.zeros_like(h_sc)
        c_sc[...] = jnp.zeros_like(c_sc)

    # Hoisted input projection: one (Tblk*B_p, D) @ (D, 4Hp) MXU pass per chunk,
    # bias folded here (off the per-step serial chain).
    gz_sc[...] = (
        jnp.dot(x_ref[...], wih_ref[...], preferred_element_type=jnp.float32)
        + b_ref[...]
    )

    whh = whh_ref[...]                      # (Hp, 4Hp) bf16, loaded once per chunk
    h = h_sc[...]                           # (B_p, Hp) f32
    c = c_sc[...]

    # Fully-unrolled recurrence over the chunk: each step is a single
    # (B_p, Hp) @ (Hp, 4Hp) matmul plus lane-aligned gate math.
    for i in range(Tblk):
        z = gz_sc[i * B_p:(i + 1) * B_p, :] + jnp.dot(
            h.astype(jnp.bfloat16), whh, preferred_element_type=jnp.float32)
        sig = jax.nn.sigmoid(z[:, :3 * Hp])     # i, f, o in one contiguous EUP pass
        g = jnp.tanh(z[:, 3 * Hp:])
        i_g = sig[:, :Hp]
        f_g = sig[:, Hp:2 * Hp]
        o_g = sig[:, 2 * Hp:]
        c_new = f_g * c + i_g * g
        h_new = o_g * jnp.tanh(c_new)
        if T_pad != T:                          # tail-padded timesteps are no-ops
            keep = (tb * Tblk + i) < T
            h_new = jnp.where(keep, h_new, h)
            c_new = jnp.where(keep, c_new, c)
        h, c = h_new, c_new

    h_sc[...] = h
    c_sc[...] = c

    # TODO(synk): nn.Dropout(p=0.2) is identity in eval/inference mode; intentional no-op.

    @pl.when(tb == pl.num_programs(0) - 1)
    def _finalize():
        out_ref[...] = (
            jnp.dot(h.astype(jnp.bfloat16), fcw_ref[...],
                    preferred_element_type=jnp.float32)
            + fcb_ref[...]
        )


def _pack_gate_cols(w, H, Hp):
    """(4H, K) torch gate-stacked matrix -> (K, 4*Hp), gates reordered to [i,f,o,g],
    each gate zero-padded from H to Hp output columns."""
    K = w.shape[1]
    out = jnp.zeros((4, Hp, K), w.dtype)
    order = (0, 1, 3, 2)                    # torch [i, f, g, o] -> kernel [i, f, o, g]
    for dst, src in enumerate(order):
        out = out.at[dst, :H, :].set(w[src * H:(src + 1) * H, :])
    return out.reshape(4 * Hp, K).T


def _pack_gate_vec(b, H, Hp):
    out = jnp.zeros((4, Hp), b.dtype)
    order = (0, 1, 3, 2)
    for dst, src in enumerate(order):
        out = out.at[dst, :H].set(b[src * H:(src + 1) * H])
    return out.reshape(1, 4 * Hp)


def lstm_model_forward(x, params, *, t_block=8):
    """x: (B, T, D) float32 -> (B, O) float32, LSTMModel.forward in eval mode."""
    B, T, D = x.shape
    H = params["w_hh"].shape[1]
    O = params["fc_w"].shape[0]

    Hp = _round_up(H, 128)                  # lane-aligned gate width
    Op = _round_up(O, 128)                  # lane-dense output store
    B_p = _round_up(B, 8)                   # sublane-aligned per-step row block
    Tblk = min(t_block, T)
    T_pad = _round_up(T, Tblk)
    n_blk = T_pad // Tblk

    # ---- layout plumbing (plain JAX): pad / reorder / transpose / cast ----
    wih_p = _pack_gate_cols(params["w_ih"], H, Hp).astype(jnp.bfloat16)        # (D, 4Hp)
    whh_p = jnp.zeros((Hp, 4 * Hp), jnp.float32).at[:H, :].set(
        _pack_gate_cols(params["w_hh"], H, Hp)).astype(jnp.bfloat16)           # (Hp, 4Hp)
    b_p = _pack_gate_vec(params["b_ih"] + params["b_hh"], H, Hp)               # (1, 4Hp)
    fcw_p = jnp.zeros((Hp, Op), jnp.float32).at[:H, :O].set(
        params["fc_w"].T).astype(jnp.bfloat16)                                 # (Hp, Op)
    fcb_p = jnp.zeros((1, Op), jnp.float32).at[0, :O].set(params["fc_b"])      # (1, Op)

    # Time-major rows so each timestep of a chunk is a contiguous tile-aligned slab.
    x_tm = jnp.transpose(x, (1, 0, 2))                                         # (T, B, D)
    x_tm = jnp.pad(x_tm, ((0, T_pad - T), (0, B_p - B), (0, 0)))
    x_rows = x_tm.reshape(T_pad * B_p, D).astype(jnp.bfloat16)

    kernel = functools.partial(
        _lstm_kernel, B_p=B_p, Hp=Hp, Tblk=Tblk, T=T, T_pad=T_pad)

    out = pl.pallas_call(
        kernel,
        out_shape=jax.ShapeDtypeStruct((B_p, Op), jnp.float32),
        grid_spec=pltpu.PrefetchScalarGridSpec(
            num_scalar_prefetch=0,
            grid=(n_blk,),
            in_specs=[
                pl.BlockSpec((Tblk * B_p, D), lambda t: (t, 0)),   # x: streamed/pipelined
                pl.BlockSpec((D, 4 * Hp), lambda t: (0, 0)),       # w_ih (resident)
                pl.BlockSpec((1, 4 * Hp), lambda t: (0, 0)),       # bias (resident)
                pl.BlockSpec((Hp, 4 * Hp), lambda t: (0, 0)),      # w_hh (resident)
                pl.BlockSpec((Hp, Op), lambda t: (0, 0)),          # fc_w (resident)
                pl.BlockSpec((1, Op), lambda t: (0, 0)),           # fc_b (resident)
            ],
            out_specs=pl.BlockSpec((B_p, Op), lambda t: (0, 0)),   # resident output
            scratch_shapes=[
                pltpu.VMEM((Tblk * B_p, 4 * Hp), jnp.float32),     # chunk gates
                pltpu.VMEM((B_p, Hp), jnp.float32),                # h state
                pltpu.VMEM((B_p, Hp), jnp.float32),                # c state
            ],
        ),
        compiler_params=pltpu.CompilerParams(
            dimension_semantics=("arbitrary",),                    # serial recurrence axis
            vmem_limit_bytes=32 * 1024 * 1024,                     # safe on v5e/v6e/v7x
        ),
    )(x_rows, wih_p, b_p, whh_p, fcw_p, fcb_p)

    return out[:B, :O]


def ref_forward(x, params):
    """Pure-JAX f32 reference mirroring torch.nn.LSTM + Linear (eval mode)."""
    B, T, D = x.shape
    H = params["w_hh"].shape[1]
    h = jnp.zeros((B, H), jnp.float32)
    c = jnp.zeros((B, H), jnp.float32)
    b = params["b_ih"] + params["b_hh"]
    for t in range(T):
        z = x[:, t, :] @ params["w_ih"].T + h @ params["w_hh"].T + b
        i = jax.nn.sigmoid(z[:, 0 * H:1 * H])
        f = jax.nn.sigmoid(z[:, 1 * H:2 * H])
        g = jnp.tanh(z[:, 2 * H:3 * H])
        o = jax.nn.sigmoid(z[:, 3 * H:4 * H])
        c = f * c + i * g
        h = o * jnp.tanh(c)
    return h @ params["fc_w"].T + params["fc_b"]


def init_params(key, input_size, hidden_size, output_size):
    """PyTorch-default-shaped params, uniform(-1/sqrt(H), 1/sqrt(H))."""
    ks = jax.random.split(key, 6)
    k = 1.0 / jnp.sqrt(jnp.float32(hidden_size))
    u = lambda kk, shape: jax.random.uniform(kk, shape, jnp.float32, -k, k)
    return {
        "w_ih": u(ks[0], (4 * hidden_size, input_size)),   # weight_ih_l0
        "w_hh": u(ks[1], (4 * hidden_size, hidden_size)),  # weight_hh_l0
        "b_ih": u(ks[2], (4 * hidden_size,)),              # bias_ih_l0
        "b_hh": u(ks[3], (4 * hidden_size,)),              # bias_hh_l0
        "fc_w": u(ks[4], (output_size, hidden_size)),      # fc.weight
        "fc_b": u(ks[5], (output_size,)),                  # fc.bias
    }


if __name__ == "__main__":
    B, T, D = 2, 8, 16          # batch, seq_len, input_size
    H, O = 50, 4                # hidden_layer_size=50 (as in the module), output_size

    key = jax.random.PRNGKey(0)
    k_x, k_p = jax.random.split(key)
    x = jax.random.normal(k_x, (B, T, D), jnp.float32)
    params = init_params(k_p, D, H, O)

    ref = ref_forward(x, params)

    # Multi-chunk path: grid of 2, h/c carried in scratch across grid steps.
    out = jax.block_until_ready(lstm_model_forward(x, params, t_block=4))
    assert out.shape == (B, O)
    assert jnp.allclose(out, ref, atol=5e-2, rtol=5e-2), (out, ref)

    # Tail-masked path: T=8 not divisible by 3 -> padded timesteps must be no-ops.
    out2 = jax.block_until_ready(lstm_model_forward(x, params, t_block=3))
    assert jnp.allclose(out2, ref, atol=5e-2, rtol=5e-2), (out2, ref)

    print("KERNEL_OK")
</pallas_src>

<mosaic_0001>
module attributes {stable_mosaic.version = 11 : i64} {
  func.func @_lstm_kernel(%arg0: i32, %arg1: memref<32x16xbf16, #tpu.memory_space<vmem>>, %arg2: memref<16x512xbf16, #tpu.memory_space<vmem>>, %arg3: memref<1x512xf32, #tpu.memory_space<vmem>>, %arg4: memref<128x512xbf16, #tpu.memory_space<vmem>>, %arg5: memref<128x128xbf16, #tpu.memory_space<vmem>>, %arg6: memref<1x128xf32, #tpu.memory_space<vmem>>, %arg7: memref<8x128xf32, #tpu.memory_space<vmem>>, %arg8: memref<32x512xf32, #tpu.memory_space<vmem>>, %arg9: memref<8x128xf32, #tpu.memory_space<vmem>>, %arg10: memref<8x128xf32, #tpu.memory_space<vmem>>) attributes {dimension_semantics = [#tpu.dimension_semantics<arbitrary>], iteration_bounds = array<i64: 2>, scalar_prefetch = 0 : i64, scratch_operands = 3 : i64, tpu.core_type = #tpu.core_type<tc>, window_params = [{transform_indices = @transform_0, window_bounds = array<i64: 32, 16>}, {pipeline_mode = #tpu.pipeline_mode<synchronous>, transform_indices = @transform_1, window_bounds = array<i64: 16, 512>}, {pipeline_mode = #tpu.pipeline_mode<synchronous>, transform_indices = @transform_2, window_bounds = array<i64: 1, 512>}, {pipeline_mode = #tpu.pipeline_mode<synchronous>, transform_indices = @transform_3, window_bounds = array<i64: 128, 512>}, {pipeline_mode = #tpu.pipeline_mode<synchronous>, transform_indices = @transform_4, window_bounds = array<i64: 128, 128>}, {pipeline_mode = #tpu.pipeline_mode<synchronous>, transform_indices = @transform_5, window_bounds = array<i64: 1, 128>}, {pipeline_mode = #tpu.pipeline_mode<synchronous>, transform_indices = @transform_6, window_bounds = array<i64: 8, 128>}]} {
    %c0_i32 = arith.constant 0 : i32
    %0 = arith.cmpi eq, %arg0, %c0_i32 : i32
    %1 = arith.extui %0 : i1 to i32
    %c0_i32_0 = arith.constant 0 : i32
    %2 = arith.cmpi ne, %1, %c0_i32_0 : i32
    scf.if %2 {
      %cst_32 = arith.constant 0.000000e+00 : f32
      %98 = vector.broadcast %cst_32 : f32 to vector<8x128xf32>
      %c0_33 = arith.constant 0 : index
      %c0_34 = arith.constant 0 : index
      %99 = vector.load %arg9[%c0_33, %c0_34] : memref<8x128xf32, #tpu.memory_space<vmem>>, vector<8x128xf32>
      tpu.vector_store %arg9[%c0_33, %c0_34], %98 {strides = array<i32>} : memref<8x128xf32, #tpu.memory_space<vmem>>, vector<8x128xf32>,
      %cst_35 = arith.constant 0.000000e+00 : f32
      %100 = vector.broadcast %cst_35 : f32 to vector<8x128xf32>
      %c0_36 = arith.constant 0 : index
      %c0_37 = arith.constant 0 : index
      %101 = vector.load %arg10[%c0_36, %c0_37] : memref<8x128xf32, #tpu.memory_space<vmem>>, vector<8x128xf32>
      tpu.vector_store %arg10[%c0_36, %c0_37], %100 {strides = array<i32>} : memref<8x128xf32, #tpu.memory_space<vmem>>, vector<8x128xf32>,
    } else {
    }
    %c0 = arith.constant 0 : index
    %c0_1 = arith.constant 0 : index
    %3 = vector.load %arg1[%c0, %c0_1] : memref<32x16xbf16, #tpu.memory_space<vmem>>, vector<32x16xbf16>
    %c0_2 = arith.constant 0 : index
    %c0_3 = arith.constant 0 : index
    %4 = vector.load %arg2[%c0_2, %c0_3] : memref<16x512xbf16, #tpu.memory_space<vmem>>, vector<16x512xbf16>
    %cst = arith.constant dense<0.000000e+00> : vector<32x512xf32>
    %5 = tpu.matmul %3, %4, %cst {dimension_numbers = #tpu.dot_dimension_numbers<[1], [0], [0], [1], [0, 0, 1, 1], [], []>} : vector<32x16xbf16>, vector<16x512xbf16>, vector<32x512xf32> -> vector<32x512xf32>
    %c0_4 = arith.constant 0 : index
    %c0_5 = arith.constant 0 : index
    %6 = vector.load %arg3[%c0_4, %c0_5] : memref<1x512xf32, #tpu.memory_space<vmem>>, vector<1x512xf32>
    %7 = vector.broadcast %6 : vector<1x512xf32> to vector<32x512xf32>
    %8 = arith.addf %5, %7 : vector<32x512xf32>
    %c0_6 = arith.constant 0 : index
    %c0_7 = arith.constant 0 : index
    %9 = vector.load %arg8[%c0_6, %c0_7] : memref<32x512xf32, #tpu.memory_space<vmem>>, vector<32x512xf32>
    tpu.vector_store %arg8[%c0_6, %c0_7], %8 {strides = array<i32>} : memref<32x512xf32, #tpu.memory_space<vmem>>, vector<32x512xf32>,
    %c0_8 = arith.constant 0 : index
    %c0_9 = arith.constant 0 : index
    %10 = vector.load %arg4[%c0_8, %c0_9] : memref<128x512xbf16, #tpu.memory_space<vmem>>, vector<128x512xbf16>
    %c0_10 = arith.constant 0 : index
    %c0_11 = arith.constant 0 : index
    %11 = vector.load %arg9[%c0_10, %c0_11] : memref<8x128xf32, #tpu.memory_space<vmem>>, vector<8x128xf32>
    %c0_12 = arith.constant 0 : index
    %c0_13 = arith.constant 0 : index
    %12 = vector.load %arg10[%c0_12, %c0_13] : memref<8x128xf32, #tpu.memory_space<vmem>>, vector<8x128xf32>
    %c0_14 = arith.constant 0 : index
    %c0_15 = arith.constant 0 : index
    %13 = vector.load %arg8[%c0_14, %c0_15] : memref<32x512xf32, #tpu.memory_space<vmem>>, vector<8x512xf32>
    %14 = arith.truncf %11 : vector<8x128xf32> to vector<8x128xbf16>
    %cst_16 = arith.constant dense<0.000000e+00> : vector<8x512xf32>
    %15 = tpu.matmul %14, %10, %cst_16 {dimension_numbers = #tpu.dot_dimension_numbers<[1], [0], [0], [1], [0, 0, 1, 1], [], []>} : vector<8x128xbf16>, vector<128x512xbf16>, vector<8x512xf32> -> vector<8x512xf32>
    %16 = arith.addf %13, %15 : vector<8x512xf32>
    %17 = vector.extract_strided_slice %16 {offsets = [0, 0], sizes = [8, 384], strides = [1, 1]} : vector<8x512xf32> to vector<8x384xf32>
    %18 = arith.negf %17 : vector<8x384xf32>
    %19 = math.exp %18 : vector<8x384xf32>
    %cst_17 = arith.constant 1.000000e+00 : f32
    %20 = vector.broadcast %cst_17 : f32 to vector<8x384xf32>
    %21 = arith.addf %20, %19 : vector<8x384xf32>
    %22 = arith.divf %20, %21 : vector<8x384xf32>
    %23 = vector.extract_strided_slice %16 {offsets = [0, 384], sizes = [8, 128], strides = [1, 1]} : vector<8x512xf32> to vector<8x128xf32>
    %24 = math.tanh %23 : vector<8x128xf32>
    %25 = vector.extract_strided_slice %22 {offsets = [0, 0], sizes = [8, 128], strides = [1, 1]} : vector<8x384xf32> to vector<8x128xf32>
    %26 = vector.extract_strided_slice %22 {offsets = [0, 128], sizes = [8, 128], strides = [1, 1]} : vector<8x384xf32> to vector<8x128xf32>
    %27 = vector.extract_strided_slice %22 {offsets = [0, 256], sizes = [8, 128], strides = [1, 1]} : vector<8x384xf32> to vector<8x128xf32>
    %28 = arith.mulf %26, %12 : vector<8x128xf32>
    %29 = arith.mulf %25, %24 : vector<8x128xf32>
    %30 = arith.addf %28, %29 : vector<8x128xf32>
    %31 = math.tanh %30 : vector<8x128xf32>
    %32 = arith.mulf %27, %31 : vector<8x128xf32>
    %c8 = arith.constant 8 : index
    %c0_18 = arith.constant 0 : index
    %33 = vector.load %arg8[%c8, %c0_18] : memref<32x512xf32, #tpu.memory_space<vmem>>, vector<8x512xf32>
    %34 = arith.truncf %32 : vector<8x128xf32> to vector<8x128xbf16>
    %cst_19 = arith.constant dense<0.000000e+00> : vector<8x512xf32>
    %35 = tpu.matmul %34, %10, %cst_19 {dimension_numbers = #tpu.dot_dimension_numbers<[1], [0], [0], [1], [0, 0, 1, 1], [], []>} : vector<8x128xbf16>, vector<128x512xbf16>, vector<8x512xf32> -> vector<8x512xf32>
    %36 = arith.addf %33, %35 : vector<8x512xf32>
    %37 = vector.extract_strided_slice %36 {offsets = [0, 0], sizes = [8, 384], strides = [1, 1]} : vector<8x512xf32> to vector<8x384xf32>
    %38 = arith.negf %37 : vector<8x384xf32>
    %39 = math.exp %38 : vector<8x384xf32>
    %cst_20 = arith.constant 1.000000e+00 : f32
    %40 = vector.broadcast %cst_20 : f32 to vector<8x384xf32>
    %41 = arith.addf %40, %39 : vector<8x384xf32>
    %42 = arith.divf %40, %41 : vector<8x384xf32>
    %43 = vector.extract_strided_slice %36 {offsets = [0, 384], sizes = [8, 128], strides = [1, 1]} : vector<8x512xf32> to vector<8x128xf32>
    %44 = math.tanh %43 : vector<8x128xf32>
    %45 = vector.extract_strided_slice %42 {offsets = [0, 0], sizes = [8, 128], strides = [1, 1]} : vector<8x384xf32> to vector<8x128xf32>
    %46 = vector.extract_strided_slice %42 {offsets = [0, 128], sizes = [8, 128], strides = [1, 1]} : vector<8x384xf32> to vector<8x128xf32>
    %47 = vector.extract_strided_slice %42 {offsets = [0, 256], sizes = [8, 128], strides = [1, 1]} : vector<8x384xf32> to vector<8x128xf32>
    %48 = arith.mulf %46, %30 : vector<8x128xf32>
    %49 = arith.mulf %45, %44 : vector<8x128xf32>
    %50 = arith.addf %48, %49 : vector<8x128xf32>
    %51 = math.tanh %50 : vector<8x128xf32>
    %52 = arith.mulf %47, %51 : vector<8x128xf32>
    %c16 = arith.constant 16 : index
    %c0_21 = arith.constant 0 : index
    %53 = vector.load %arg8[%c16, %c0_21] : memref<32x512xf32, #tpu.memory_space<vmem>>, vector<8x512xf32>
    %54 = arith.truncf %52 : vector<8x128xf32> to vector<8x128xbf16>
    %cst_22 = arith.constant dense<0.000000e+00> : vector<8x512xf32>
    %55 = tpu.matmul %54, %10, %cst_22 {dimension_numbers = #tpu.dot_dimension_numbers<[1], [0], [0], [1], [0, 0, 1, 1], [], []>} : vector<8x128xbf16>, vector<128x512xbf16>, vector<8x512xf32> -> vector<8x512xf32>
    %56 = arith.addf %53, %55 : vector<8x512xf32>
    %57 = vector.extract_strided_slice %56 {offsets = [0, 0], sizes = [8, 384], strides = [1, 1]} : vector<8x512xf32> to vector<8x384xf32>
    %58 = arith.negf %57 : vector<8x384xf32>
    %59 = math.exp %58 : vector<8x384xf32>
    %cst_23 = arith.constant 1.000000e+00 : f32
    %60 = vector.broadcast %cst_23 : f32 to vector<8x384xf32>
    %61 = arith.addf %60, %59 : vector<8x384xf32>
    %62 = arith.divf %60, %61 : vector<8x384xf32>
    %63 = vector.extract_strided_slice %56 {offsets = [0, 384], sizes = [8, 128], strides = [1, 1]} : vector<8x512xf32> to vector<8x128xf32>
    %64 = math.tanh %63 : vector<8x128xf32>
    %65 = vector.extract_strided_slice %62 {offsets = [0, 0], sizes = [8, 128], strides = [1, 1]} : vector<8x384xf32> to vector<8x128xf32>
    %66 = vector.extract_strided_slice %62 {offsets = [0, 128], sizes = [8, 128], strides = [1, 1]} : vector<8x384xf32> to vector<8x128xf32>
    %67 = vector.extract_strided_slice %62 {offsets = [0, 256], sizes = [8, 128], strides = [1, 1]} : vector<8x384xf32> to vector<8x128xf32>
    %68 = arith.mulf %66, %50 : vector<8x128xf32>
    %69 = arith.mulf %65, %64 : vector<8x128xf32>
    %70 = arith.addf %68, %69 : vector<8x128xf32>
    %71 = math.tanh %70 : vector<8x128xf32>
    %72 = arith.mulf %67, %71 : vector<8x128xf32>
    %c24 = arith.constant 24 : index
    %c0_24 = arith.constant 0 : index
    %73 = vector.load %arg8[%c24, %c0_24] : memref<32x512xf32, #tpu.memory_space<vmem>>, vector<8x512xf32>
    %74 = arith.truncf %72 : vector<8x128xf32> to vector<8x128xbf16>
    %cst_25 = arith.constant dense<0.000000e+00> : vector<8x512xf32>
    %75 = tpu.matmul %74, %10, %cst_25 {dimension_numbers = #tpu.dot_dimension_numbers<[1], [0], [0], [1], [0, 0, 1, 1], [], []>} : vector<8x128xbf16>, vector<128x512xbf16>, vector<8x512xf32> -> vector<8x512xf32>
    %76 = arith.addf %73, %75 : vector<8x512xf32>
    %77 = vector.extract_strided_slice %76 {offsets = [0, 0], sizes = [8, 384], strides = [1, 1]} : vector<8x512xf32> to vector<8x384xf32>
    %78 = arith.negf %77 : vector<8x384xf32>
    %79 = math.exp %78 : vector<8x384xf32>
    %cst_26 = arith.constant 1.000000e+00 : f32
    %80 = vector.broadcast %cst_26 : f32 to vector<8x384xf32>
    %81 = arith.addf %80, %79 : vector<8x384xf32>
    %82 = arith.divf %80, %81 : vector<8x384xf32>
    %83 = vector.extract_strided_slice %76 {offsets = [0, 384], sizes = [8, 128], strides = [1, 1]} : vector<8x512xf32> to vector<8x128xf32>
    %84 = math.tanh %83 : vector<8x128xf32>
    %85 = vector.extract_strided_slice %82 {offsets = [0, 0], sizes = [8, 128], strides = [1, 1]} : vector<8x384xf32> to vector<8x128xf32>
    %86 = vector.extract_strided_slice %82 {offsets = [0, 128], sizes = [8, 128], strides = [1, 1]} : vector<8x384xf32> to vector<8x128xf32>
    %87 = vector.extract_strided_slice %82 {offsets = [0, 256], sizes = [8, 128], strides = [1, 1]} : vector<8x384xf32> to vector<8x128xf32>
    %88 = arith.mulf %86, %70 : vector<8x128xf32>
    %89 = arith.mulf %85, %84 : vector<8x128xf32>
    %90 = arith.addf %88, %89 : vector<8x128xf32>
    %91 = math.tanh %90 : vector<8x128xf32>
    %92 = arith.mulf %87, %91 : vector<8x128xf32>
    %c0_27 = arith.constant 0 : index
    %c0_28 = arith.constant 0 : index
    %93 = vector.load %arg9[%c0_27, %c0_28] : memref<8x128xf32, #tpu.memory_space<vmem>>, vector<8x128xf32>
    tpu.vector_store %arg9[%c0_27, %c0_28], %92 {strides = array<i32>} : memref<8x128xf32, #tpu.memory_space<vmem>>, vector<8x128xf32>,
    %c0_29 = arith.constant 0 : index
    %c0_30 = arith.constant 0 : index
    %94 = vector.load %arg10[%c0_29, %c0_30] : memref<8x128xf32, #tpu.memory_space<vmem>>, vector<8x128xf32>
    tpu.vector_store %arg10[%c0_29, %c0_30], %90 {strides = array<i32>} : memref<8x128xf32, #tpu.memory_space<vmem>>, vector<8x128xf32>,
    %c1_i32 = arith.constant 1 : i32
    %95 = arith.cmpi eq, %arg0, %c1_i32 : i32
    %96 = arith.extui %95 : i1 to i32
    %c0_i32_31 = arith.constant 0 : i32
    %97 = arith.cmpi ne, %96, %c0_i32_31 : i32
    scf.if %97 {
      %98 = arith.truncf %92 : vector<8x128xf32> to vector<8x128xbf16>
      %c0_32 = arith.constant 0 : index
      %c0_33 = arith.constant 0 : index
      %99 = vector.load %arg5[%c0_32, %c0_33] : memref<128x128xbf16, #tpu.memory_space<vmem>>, vector<128x128xbf16>
      %cst_34 = arith.constant dense<0.000000e+00> : vector<8x128xf32>
      %100 = tpu.matmul %98, %99, %cst_34 {dimension_numbers = #tpu.dot_dimension_numbers<[1], [0], [0], [1], [0, 0, 1, 1], [], []>} : vector<8x128xbf16>, vector<128x128xbf16>, vector<8x128xf32> -> vector<8x128xf32>
      %c0_35 = arith.constant 0 : index
      %c0_36 = arith.constant 0 : index
      %101 = vector.load %arg6[%c0_35, %c0_36] : memref<1x128xf32, #tpu.memory_space<vmem>>, vector<1x128xf32>
      %102 = vector.broadcast %101 : vector<1x128xf32> to vector<8x128xf32>
      %103 = arith.addf %100, %102 : vector<8x128xf32>
      %c0_37 = arith.constant 0 : index
      %c0_38 = arith.constant 0 : index
      %104 = vector.load %arg7[%c0_37, %c0_38] : memref<8x128xf32, #tpu.memory_space<vmem>>, vector<8x128xf32>
      tpu.vector_store %arg7[%c0_37, %c0_38], %103 {strides = array<i32>} : memref<8x128xf32, #tpu.memory_space<vmem>>, vector<8x128xf32>,
    } else {
    }
    return
  }
  func.func @transform_0(%arg0: i32) -> (i32, i32) {
    %c0_i32 = arith.constant 0 : i32
    %c0_i32_0 = arith.constant 0 : i32
    return %arg0, %c0_i32 : i32, i32
  }
  func.func @transform_1(%arg0: i32) -> (i32, i32) {
    %c0_i32 = arith.constant 0 : i32
    %c0_i32_0 = arith.constant 0 : i32
    %c0_i32_1 = arith.constant 0 : i32
    return %c0_i32, %c0_i32_0 : i32, i32
  }
  func.func @transform_2(%arg0: i32) -> (i32, i32) {
    %c0_i32 = arith.constant 0 : i32
    %c0_i32_0 = arith.constant 0 : i32
    %c0_i32_1 = arith.constant 0 : i32
    return %c0_i32, %c0_i32_0 : i32, i32
  }
  func.func @transform_3(%arg0: i32) -> (i32, i32) {
    %c0_i32 = arith.constant 0 : i32
    %c0_i32_0 = arith.constant 0 : i32
    %c0_i32_1 = arith.constant 0 : i32
    return %c0_i32, %c0_i32_0 : i32, i32
  }
  func.func @transform_4(%arg0: i32) -> (i32, i32) {
    %c0_i32 = arith.constant 0 : i32
    %c0_i32_0 = arith.constant 0 : i32
    %c0_i32_1 = arith.constant 0 : i32
    return %c0_i32, %c0_i32_0 : i32, i32
  }
  func.func @transform_5(%arg0: i32) -> (i32, i32) {
    %c0_i32 = arith.constant 0 : i32
    %c0_i32_0 = arith.constant 0 : i32
    %c0_i32_1 = arith.constant 0 : i32
    return %c0_i32, %c0_i32_0 : i32, i32
  }
  func.func @transform_6(%arg0: i32) -> (i32, i32) {
    %c0_i32 = arith.constant 0 : i32
    %c0_i32_0 = arith.constant 0 : i32
    %c0_i32_1 = arith.constant 0 : i32
    return %c0_i32, %c0_i32_0 : i32, i32
  }
}

</mosaic_0001>

<llo_original>
// kernel: tpu_custom_call.1
$region0: #{tpu_custom_call.1}
  #allocation0 [shape = 'u32[]', space=smem, size = 0x4, offset = 0x4, fixed_abs, tag = 'smem constant byte address 0x4 - core index']
  #allocation1 [shape = 'u32[144,128]{1,0:T(1,128)}', space=vmem, size = 0x12000, scoped, tag = 'internal scratch']
  #allocation2 [shape = 'f32[32,512]{1,0:T(8,128)}', space=vmem, size = 0x10000, scoped, tag = 'scratch operand']
  #allocation3 [shape = 'f32[8,128]{1,0:T(8,128)}', space=vmem, size = 0x1000, scoped, tag = 'scratch operand']
  #allocation4 [shape = 'f32[8,128]{1,0:T(8,128)}', space=vmem, size = 0x1000, scoped, tag = 'scratch operand']
  %s0 = inlined_call_operand.vmem [shape: bf16[64,16], index: 0, kind: input, shape index: {}]
  %s1 = inlined_call_operand.vmem [shape: bf16[16,512], index: 1, kind: input, shape index: {}]
  %s2 = inlined_call_operand.vmem [shape: f32[1,512], index: 2, kind: input, shape index: {}]
  %s3 = inlined_call_operand.hbm [shape: bf16[128,512], index: 3, kind: input, shape index: {}]
  %s4 = inlined_call_operand.hbm [shape: bf16[128,128], index: 4, kind: input, shape index: {}]
  %s5 = inlined_call_operand.vmem [shape: f32[1,128], index: 5, kind: input, shape index: {}]
  %s6 = inlined_call_operand.hbm [shape: f32[8,128], index: 6, kind: output, shape index: {}]
  %s7 = sld [smem:[#allocation0]]
  $region73: #{tpu_custom_call.1} parent=0
    _
  %s9 = ssub.s32 1, %s7
  %s10 = scalar_select 0, %s9, %s7
  $region1: #{tpu_custom_call.1} parent=0
    #allocation5 [shape = 'u8[131072]{0}', space=vmem, size = 0x20000, scoped, tag = 'input window, operand 3, single buffered']
    #allocation6 [shape = 's32[2]{0}', space=sflag, size = 0x8, scoped, tag = 'scoped memory for tpu_custom_call.1']
    #allocation7 [shape = 's32[2]{0}', space=sflag, size = 0x8, scoped, tag = 'scoped memory for tpu_custom_call.1']
    #allocation8 [shape = 'u8[32768]{0}', space=vmem, size = 0x8000, scoped, tag = 'input window, operand 4, single buffered']
    #allocation9 [shape = 's32[1]{0}', space=sflag, size = 0x4, scoped, tag = 'scoped memory for tpu_custom_call.1']
    #allocation10 [shape = 'u8[4096]{0}', space=vmem, size = 0x1000, scoped, tag = 'output window, operand 0, single buffered']
    %11 = vsyncpa [#allocation6], 0
    %12 = vsyncpa [#allocation9], 0
    %13 = vsyncpa [#allocation7], 0
    loop: start=0, step=1, limit=4
    $region2: #{tpu_custom_call.1} parent=1 // loop_pre_header
      _
    $region3: #{tpu_custom_call.1} parent=1 // loop_header
      %s15 = sphi 0, %s19
      %p16 = scmp.ge.s32.totalorder %s15, 4
      %s25 = sphi 0, %s27
      %s28 = sphi 0, %s25
      %s29 = sphi 0, %s28
      %s45 = sphi 0, %s29
      %s49 = sphi 0, %s49
      %s51 = sphi 0, %s49
      %s52 = sphi 0, %s51
      %s66 = sphi 0, %s52
      %s70 = sphi 0, %s70
      %s72 = sphi 0, %s70
      %s73 = sphi 0, %s72
      %s87 = sphi 0, %s73
      %s91 = sphi 0, %s91
      %s93 = sphi 0, %s91
      %s94 = sphi 0, %s93
      %s108 = sphi 0, %s94
      %s112 = sphi 0, %s112
      %s114 = sphi 0, %s112
      %s115 = sphi 0, %s114
      %s129 = sphi 0, %s115
      %s133 = sphi 0, %s133
      %s135 = sphi 0, %s133
      %s136 = sphi 0, %s135
      %s150 = sphi 0, %s136
      %s154 = sphi 0, %s154
      %s156 = sphi 0, %s154
      %s157 = sphi 0, %s156
      %s171 = sphi 0, %s157
    $region4: #{tpu_custom_call.1} parent=1 // loop_header_branch
      %18 = sbr.rel (%p16) target = $region8
    $region5: #{tpu_custom_call.1} parent=1 // loop_body
      %s20 = ssub.s32 %s15, 1
      %s21 = ssub.s32 %s15, 2
      %s22 = sadd.s32 %s15, 1
      %s23 = ssub.s32 %s15, %s22
      %p24 = scmp.eq.s32.totalorder %s23, 0
      %s26 = sadd.s32 %s25, 1
      %s27 = scalar_select %p24, %s25, %s26
      %p30 = pneg %p24
      %p31 = scmp.eq.s32.totalorder %s15, 1
      %p32 = por %p30, %p31
      %p33 = scmp.ne.s32.totalorder %s25, %s28
      %p34 = scmp.eq.s32.totalorder %s15, 0
      %p35 = por %p33, %p34
      %p36 = scmp.ne.s32.totalorder %s25, %s28
      %p37 = scmp.eq.s32.totalorder %s20, 1
      %p38 = por %p36, %p37
      %p39 = scmp.ne.s32.totalorder %s28, %s29
      %p40 = scmp.eq.s32.totalorder %s20, 0
      %p41 = por %p39, %p40
      %p42 = scmp.ne.s32.totalorder %s28, %s29
      %p43 = scmp.eq.s32.totalorder %s21, 1
      %p44 = por %p42, %p43
      %p46 = scmp.ne.s32.totalorder %s29, %s45
      %p47 = scmp.eq.s32.totalorder %s21, 0
      %p48 = por %p46, %p47
      %s50 = sadd.s32 %s49, 1
      %p53 = scmp.eq.s32.totalorder %s15, 1
      %p54 = scmp.ne.s32.totalorder %s49, %s51
      %p55 = scmp.eq.s32.totalorder %s15, 0
      %p56 = por %p54, %p55
      %p57 = scmp.ne.s32.totalorder %s49, %s51
      %p58 = scmp.eq.s32.totalorder %s20, 1
      %p59 = por %p57, %p58
      %p60 = scmp.ne.s32.totalorder %s51, %s52
      %p61 = scmp.eq.s32.totalorder %s20, 0
      %p62 = por %p60, %p61
      %p63 = scmp.ne.s32.totalorder %s51, %s52
      %p64 = scmp.eq.s32.totalorder %s21, 1
      %p65 = por %p63, %p64
      %p67 = scmp.ne.s32.totalorder %s52, %s66
      %p68 = scmp.eq.s32.totalorder %s21, 0
      %p69 = por %p67, %p68
      %s71 = sadd.s32 %s70, 1
      %p74 = scmp.eq.s32.totalorder %s15, 1
      %p75 = scmp.ne.s32.totalorder %s70, %s72
      %p76 = scmp.eq.s32.totalorder %s15, 0
      %p77 = por %p75, %p76
      %p78 = scmp.ne.s32.totalorder %s70, %s72
      %p79 = scmp.eq.s32.totalorder %s20, 1
      %p80 = por %p78, %p79
      %p81 = scmp.ne.s32.totalorder %s72, %s73
      %p82 = scmp.eq.s32.totalorder %s20, 0
      %p83 = por %p81, %p82
      %p84 = scmp.ne.s32.totalorder %s72, %s73
      %p85 = scmp.eq.s32.totalorder %s21, 1
      %p86 = por %p84, %p85
      %p88 = scmp.ne.s32.totalorder %s73, %s87
      %p89 = scmp.eq.s32.totalorder %s21, 0
      %p90 = por %p88, %p89
      %s92 = sadd.s32 %s91, 1
      %p95 = scmp.eq.s32.totalorder %s15, 1
      %p96 = scmp.ne.s32.totalorder %s91, %s93
      %p97 = scmp.eq.s32.totalorder %s15, 0
      %p98 = por %p96, %p97
      %p99 = scmp.ne.s32.totalorder %s91, %s93
      %p100 = scmp.eq.s32.totalorder %s20, 1
      %p101 = por %p99, %p100
      %p102 = scmp.ne.s32.totalorder %s93, %s94
      %p103 = scmp.eq.s32.totalorder %s20, 0
      %p104 = por %p102, %p103
      %p105 = scmp.ne.s32.totalorder %s93, %s94
      %p106 = scmp.eq.s32.totalorder %s21, 1
      %p107 = por %p105, %p106
      %p109 = scmp.ne.s32.totalorder %s94, %s108
      %p110 = scmp.eq.s32.totalorder %s21, 0
      %p111 = por %p109, %p110
      %s113 = sadd.s32 %s112, 1
      %p116 = scmp.eq.s32.totalorder %s15, 1
      %p117 = scmp.ne.s32.totalorder %s112, %s114
      %p118 = scmp.eq.s32.totalorder %s15, 0
      %p119 = por %p117, %p118
      %p120 = scmp.ne.s32.totalorder %s112, %s114
      %p121 = scmp.eq.s32.totalorder %s20, 1
      %p122 = por %p120, %p121
      %p123 = scmp.ne.s32.totalorder %s114, %s115
      %p124 = scmp.eq.s32.totalorder %s20, 0
      %p125 = por %p123, %p124
      %p126 = scmp.ne.s32.totalorder %s114, %s115
      %p127 = scmp.eq.s32.totalorder %s21, 1
      %p128 = por %p126, %p127
      %p130 = scmp.ne.s32.totalorder %s115, %s129
      %p131 = scmp.eq.s32.totalorder %s21, 0
      %p132 = por %p130, %p131
      %s134 = sadd.s32 %s133, 1
      %p137 = scmp.eq.s32.totalorder %s15, 1
      %p138 = scmp.ne.s32.totalorder %s133, %s135
      %p139 = scmp.eq.s32.totalorder %s15, 0
      %p140 = por %p138, %p139
      %p141 = scmp.ne.s32.totalorder %s133, %s135
      %p142 = scmp.eq.s32.totalorder %s20, 1
      %p143 = por %p141, %p142
      %p144 = scmp.ne.s32.totalorder %s135, %s136
      %p145 = scmp.eq.s32.totalorder %s20, 0
      %p146 = por %p144, %p145
      %p147 = scmp.ne.s32.totalorder %s135, %s136
      %p148 = scmp.eq.s32.totalorder %s21, 1
      %p149 = por %p147, %p148
      %p151 = scmp.ne.s32.totalorder %s136, %s150
      %p152 = scmp.eq.s32.totalorder %s21, 0
      %p153 = por %p151, %p152
      %s155 = sadd.s32 %s154, 1
      %p158 = scmp.eq.s32.totalorder %s15, 1
      %p159 = scmp.ne.s32.totalorder %s154, %s156
      %p160 = scmp.eq.s32.totalorder %s15, 0
      %p161 = por %p159, %p160
      %p162 = scmp.ne.s32.totalorder %s154, %s156
      %p163 = scmp.eq.s32.totalorder %s20, 1
      %p164 = por %p162, %p163
      %p165 = scmp.ne.s32.totalorder %s156, %s157
      %p166 = scmp.eq.s32.totalorder %s20, 0
      %p167 = por %p165, %p166
      %p168 = scmp.ne.s32.totalorder %s156, %s157
      %p169 = scmp.eq.s32.totalorder %s21, 1
      %p170 = por %p168, %p169
      %p172 = scmp.ne.s32.totalorder %s157, %s171
      %p173 = scmp.eq.s32.totalorder %s21, 0
      %p174 = por %p172, %p173
      %p175 = scmp.le.s32.totalorder 1, %s15
      %p176 = scmp.lt.s32.totalorder %s15, 3
      %p177 = pnand %p175, %p176
      %p178 = pneg %p177
      // Predicated region
      $region9: #{tpu_custom_call.1} parent=5 // pred_check
        _
      $region10: #{tpu_custom_call.1} parent=5 // pred_check_branch
        %180 = sbr.rel (%p177) target = $region12
      $region11: #{tpu_custom_call.1} parent=5 // pred_region
        %s181 = ssub.s32 %s15, 1
        // Predicated region
        $region13: #{tpu_custom_call.1} parent=11 // pred_check
          %p182 = pneg %p62
        $region14: #{tpu_custom_call.1} parent=11 // pred_check_branch
          %184 = sbr.rel (%p182) target = $region16
        $region15: #{tpu_custom_call.1} parent=11 // pred_region
          _
        $region16: #{tpu_custom_call.1} parent=11 // pred_fallthru
          _
        // Predicated region
        $region17: #{tpu_custom_call.1} parent=11 // pred_check
          %p185 = pneg %p83
        $region18: #{tpu_custom_call.1} parent=11 // pred_check_branch
          %187 = sbr.rel (%p185) target = $region20
        $region19: #{tpu_custom_call.1} parent=11 // pred_region
          _
        $region20: #{tpu_custom_call.1} parent=11 // pred_fallthru
          _
        // Predicated region
        $region21: #{tpu_custom_call.1} parent=11 // pred_check
          %p188 = pneg %p104
        $region22: #{tpu_custom_call.1} parent=11 // pred_check_branch
          %190 = sbr.rel (%p188) target = $region24
        $region23: #{tpu_custom_call.1} parent=11 // pred_region
          %s192 = ssub.s32 4096, 4096
          %193 = vsyncadd [#allocation6], %s192
          %s194 = sshll.u32 [#allocation5], 4
          %s195 = int_to_ptr.vmem [resolvable:$true] %s194
          %200 = dma.hbm_to_vmem [thread:$0]  %s3, 4096, %s195, [#allocation6], 256, 256, 16
        $region24: #{tpu_custom_call.1} parent=11 // pred_fallthru
          _
        // Predicated region
        $region25: #{tpu_custom_call.1} parent=11 // pred_check
          %p201 = pneg %p125
        $region26: #{tpu_custom_call.1} parent=11 // pred_check_branch
          %203 = sbr.rel (%p201) target = $region28
        $region27: #{tpu_custom_call.1} parent=11 // pred_region
          %s205 = ssub.s32 1024, 1024
          %206 = vsyncadd [#allocation9], %s205
          %s207 = sshll.u32 [#allocation8], 4
          %s208 = int_to_ptr.vmem [resolvable:$true] %s207
          %213 = dma.hbm_to_vmem [thread:$0]  %s4, 1024, %s208, [#allocation9], 64, 64, 4
        $region28: #{tpu_custom_call.1} parent=11 // pred_fallthru
          _
        // Predicated region
        $region29: #{tpu_custom_call.1} parent=11 // pred_check
          %p214 = pneg %p146
        $region30: #{tpu_custom_call.1} parent=11 // pred_check_branch
          %216 = sbr.rel (%p214) target = $region32
        $region31: #{tpu_custom_call.1} parent=11 // pred_region
          _
        $region32: #{tpu_custom_call.1} parent=11 // pred_fallthru
          _
      $region12: #{tpu_custom_call.1} parent=5 // pred_fallthru
        _
      %p217 = scmp.lt.s32.totalorder %s15, 2
      // Predicated region
      $region33: #{tpu_custom_call.1} parent=5 // pred_check
        %p218 = pneg %p217
      $region34: #{tpu_custom_call.1} parent=5 // pred_check_branch
        %220 = sbr.rel (%p218) target = $region36
      $region35: #{tpu_custom_call.1} parent=5 // pred_region
        // Predicated region
        $region37: #{tpu_custom_call.1} parent=35 // pred_check
          %p221 = pneg %p35
        $region38: #{tpu_custom_call.1} parent=35 // pred_check_branch
          %223 = sbr.rel (%p221) target = $region40
        $region39: #{tpu_custom_call.1} parent=35 // pred_region
          %s224 = smul.u32 4, %s15
          %p225 = scmp.lt.s32.totalorder %s224, 7
          %s226 = scalar_select %p225, %s224, 7
          %s227 = smul.addr %s226, 4
          %s228 = scalar_lea.vmem %s0, %s227
          %s229 = smul.u32 4, %s15
        $region40: #{tpu_custom_call.1} parent=35 // pred_fallthru
          _
      $region36: #{tpu_custom_call.1} parent=5 // pred_fallthru
        _
      %p230 = scmp.le.s32.totalorder 1, %s15
      %p231 = scmp.lt.s32.totalorder %s15, 3
      %p232 = pnand %p230, %p231
      %p233 = pneg %p232
      // Predicated region
      $region41: #{tpu_custom_call.1} parent=5 // pred_check
        _
      $region42: #{tpu_custom_call.1} parent=5 // pred_check_branch
        %235 = sbr.rel (%p232) target = $region44
      $region43: #{tpu_custom_call.1} parent=5 // pred_region
        %s236 = ssub.s32 %s15, 1
        // Predicated region
        $region45: #{tpu_custom_call.1} parent=43 // pred_check
          %p237 = pneg %p104
        $region46: #{tpu_custom_call.1} parent=43 // pred_check_branch
          %239 = sbr.rel (%p237) target = $region48
        $region47: #{tpu_custom_call.1} parent=43 // pred_region
          %240 = dma.done [#allocation6], 4096
        $region48: #{tpu_custom_call.1} parent=43 // pred_fallthru
          _
        // Predicated region
        $region49: #{tpu_custom_call.1} parent=43 // pred_check
          %p241 = pneg %p125
        $region50: #{tpu_custom_call.1} parent=43 // pred_check_branch
          %243 = sbr.rel (%p241) target = $region52
        $region51: #{tpu_custom_call.1} parent=43 // pred_region
          %244 = dma.done [#allocation9], 1024
        $region52: #{tpu_custom_call.1} parent=43 // pred_fallthru
          _
        %s245 = smul.u32 4, %s20
        %p246 = scmp.lt.s32.totalorder %s245, 7
        %s247 = scalar_select %p246, %s245, 7
        %s248 = smul.addr %s247, 4
        %s249 = scalar_lea.vmem %s0, %s248
        %p250 = pneg %p41
        %p251 = pneg %p38
        %p252 = pneg %p62
        %p253 = pneg %p59
        %p254 = pneg %p83
        %p255 = pneg %p80
        %p256 = pneg %p104
        %p257 = pneg %p101
        %p258 = pneg %p125
        %p259 = pneg %p122
        %p260 = pneg %p146
        %p261 = pneg %p143
        %p262 = pneg %p167
        %p263 = pneg %p164
        %s264 = smul.u32 4, %s20
        %p265 = scmp.lt.s32.totalorder %s264, 7
        %s266 = scalar_select %p265, %s264, 7
        %s267 = smul.addr %s266, 4
        %s268 = scalar_lea.vmem %s0, %s267
        %s269 = smul.u32 4, %s20
        %p271 = scmp.eq.s32.totalorder %s20, 0
        // Predicated region
        $region53: #{tpu_custom_call.1} parent=43 // pred_check
          %p272 = pneg %p271
        $region54: #{tpu_custom_call.1} parent=43 // pred_check_branch
          %274 = sbr.rel (%p272) target = $region56
        $region55: #{tpu_custom_call.1} parent=43 // pred_region
          %275 = vst [vmem:[#allocation3] sm:$0xff] 0.0
          %276 = vst [vmem:[#allocation4] sm:$0xff] 0.0
        $region56: #{tpu_custom_call.1} parent=43 // pred_fallthru
          _
        %v277 = vld [vmem:[%s268] sm:$0xf]
        %v278 = vld [vmem:[%s268 + $0x4] sm:$0xf]
        %v279 = vld [vmem:[%s268 + $0x8] sm:$0xf]
        %v280 = vld [vmem:[%s268 + $0xc] sm:$0xf]
        %v281 = vld [vmem:[%s1] sm:$0xff]
        %v282 = vld [vmem:[%s1 + $0x8] sm:$0xff]
        %v283 = vld [vmem:[%s1 + $0x10] sm:$0xff]
        %v284 = vld [vmem:[%s1 + $0x18] sm:$0xff]
        %v285 = vld [vmem:[%s2] sm:$0xf]
        %v287 = vlaneseq
        %v288 = vshrl.u32 %v287, 7
        %v289 = vsub.s32 0, %v288
        %v290 = vrot.slane %v285, %v289
        %v291 = vlaneseq
        %v292 = vshrl.u32 %v291, 7
        %v293 = vsub.s32 1, %v292
        %v294 = vrot.slane %v285, %v293
        %v295 = vlaneseq
        %v296 = vshrl.u32 %v295, 7
        %v297 = vsub.s32 2, %v296
        %v298 = vrot.slane %v285, %v297
        %v299 = vlaneseq
        %v300 = vshrl.u32 %v299, 7
        %v301 = vsub.s32 3, %v300
        %v302 = vrot.slane %v285, %v301
        %v311 = vunpack.c.l.b16 %v277
        %v312 = vunpack.c.l.b16 %v278
        %v313 = vunpack.c.l.b16 %v279
        %v314 = vunpack.c.l.b16 %v280
        %v315 = vpack.c.b16 %v312, %v311
        %v316 = vpack.c.b16 %v314, %v313
        %v321 = vunpack.c.l.b16 %v281
        %v322 = vunpack.c.h.b16 %v281
        %v323 = vunpack.c.l.b16 %v282
        %v324 = vunpack.c.h.b16 %v282
        %v325 = vunpack.c.l.b16 %v283
        %v326 = vunpack.c.h.b16 %v283
        %v327 = vunpack.c.l.b16 %v284
        %v328 = vunpack.c.h.b16 %v284
        %v329 = vpack.c.b16 %v325, %v321
        %v330 = vpack.c.b16 %v326, %v322
        %v331 = vpack.c.b16 %v327, %v323
        %v332 = vpack.c.b16 %v328, %v324
        %vm337 = vcmask 130048
        %v339 = vsel %vm337, %v315, 0
        %v342 = vsel %vm337, %v316, 0
        %344 = vmatprep.subr.bf16.mxu0 0
        %345 = vmatpush1.bf16.msra.mxu0 0
        %346 = vmatprep.subr.bf16.mxu0 0
        %347 = vmatpush1.bf16.msra.mxu0 0
        %348 = vmatprep.subr.bf16.mxu0 0
        %349 = vmatpush1.bf16.msra.mxu0 0
        %350 = vmatprep.subr.bf16.mxu0 0
        %351 = vmatpush1.bf16.msra.mxu0 0
        %352 = vmatprep.subr.bf16.mxu0 0
        %353 = vmatpush1.bf16.msra.mxu0 0
        %354 = vmatprep.subr.bf16.mxu0 0
        %355 = vmatpush1.bf16.msra.mxu0 0
        %356 = vmatprep.subr.bf16.mxu0 0
        %357 = vmatpush1.bf16.msra.mxu0 0
        %358 = vmatprep.subr.bf16.mxu0 %v330
        %359 = vmatpush1.bf16.msra.mxu0 %v329
        %360 = vmatprep.subr.bf16.mxu0 0
        %361 = vmatpush2.bf16.msra.mxu0 0
        %362 = vmatprep.subr.bf16.mxu0 0
        %363 = vmatpush2.bf16.msra.mxu0 0
        %364 = vmatprep.subr.bf16.mxu0 0
        %365 = vmatpush2.bf16.msra.mxu0 0
        %366 = vmatprep.subr.bf16.mxu0 0
        %367 = vmatpush2.bf16.msra.mxu0 0
        %368 = vmatprep.subr.bf16.mxu0 0
        %369 = vmatpush2.bf16.msra.mxu0 0
        %370 = vmatprep.subr.bf16.mxu0 0
        %371 = vmatpush2.bf16.msra.mxu0 0
        %372 = vmatprep.subr.bf16.mxu0 0
        %373 = vmatpush2.bf16.msra.mxu0 0
        %374 = vmatprep.subr.bf16.mxu0 0
        %375 = vmatpush2.bf16.msra.mxu0 0
        %376 = vmatprep.mubr.bf16.mxu0 0
        %377 = vmatmul.mubr.bf16.gmra.mxu0 %v339
        %v378 = vpop.f32.mrf.mxu0
        %v379 = vadd.f32 %v290, %v378
        %v380 = vpop.f32.mrf.mxu0
        %v381 = vadd.f32 %v294, %v380
        %v382 = vpop.f32.mrf.mxu0
        %v383 = vadd.f32 %v290, %v382
        %v384 = vpop.f32.mrf.mxu0
        %v385 = vadd.f32 %v294, %v384
        %386 = vmatprep.mubr.bf16.mxu0 0
        %387 = vmatmul.mubr.bf16.gmra.mxu0 %v342
        %v388 = vpop.f32.mrf.mxu0
        %v389 = vadd.f32 %v290, %v388
        %v390 = vpop.f32.mrf.mxu0
        %v391 = vadd.f32 %v294, %v390
        %v392 = vpop.f32.mrf.mxu0
        %v393 = vadd.f32 %v290, %v392
        %v394 = vpop.f32.mrf.mxu0
        %v395 = vadd.f32 %v294, %v394
        %396 = vdwg.mxu0
        %397 = vmatprep.subr.bf16.mxu0 0
        %398 = vmatpush1.bf16.msra.mxu0 0
        %399 = vmatprep.subr.bf16.mxu0 0
        %400 = vmatpush1.bf16.msra.mxu0 0
        %401 = vmatprep.subr.bf16.mxu0 0
        %402 = vmatpush1.bf16.msra.mxu0 0
        %403 = vmatprep.subr.bf16.mxu0 0
        %404 = vmatpush1.bf16.msra.mxu0 0
        %405 = vmatprep.subr.bf16.mxu0 0
        %406 = vmatpush1.bf16.msra.mxu0 0
        %407 = vmatprep.subr.bf16.mxu0 0
        %408 = vmatpush1.bf16.msra.mxu0 0
        %409 = vmatprep.subr.bf16.mxu0 0
        %410 = vmatpush1.bf16.msra.mxu0 0
        %411 = vmatprep.subr.bf16.mxu0 %v332
        %412 = vmatpush1.bf16.msra.mxu0 %v331
        %413 = vmatprep.subr.bf16.mxu0 0
        %414 = vmatpush2.bf16.msra.mxu0 0
        %415 = vmatprep.subr.bf16.mxu0 0
        %416 = vmatpush2.bf16.msra.mxu0 0
        %417 = vmatprep.subr.bf16.mxu0 0
        %418 = vmatpush2.bf16.msra.mxu0 0
        %419 = vmatprep.subr.bf16.mxu0 0
        %420 = vmatpush2.bf16.msra.mxu0 0
        %421 = vmatprep.subr.bf16.mxu0 0
        %422 = vmatpush2.bf16.msra.mxu0 0
        %423 = vmatprep.subr.bf16.mxu0 0
        %424 = vmatpush2.bf16.msra.mxu0 0
        %425 = vmatprep.subr.bf16.mxu0 0
        %426 = vmatpush2.bf16.msra.mxu0 0
        %427 = vmatprep.subr.bf16.mxu0 0
        %428 = vmatpush2.bf16.msra.mxu0 0
        %429 = vmatprep.mubr.bf16.mxu0 0
        %430 = vmatmul.mubr.bf16.gmra.mxu0 %v339
        %v431 = vpop.f32.mrf.mxu0
        %v432 = vadd.f32 %v298, %v431
        %v433 = vpop.f32.mrf.mxu0
        %v434 = vadd.f32 %v302, %v433
        %v435 = vpop.f32.mrf.mxu0
        %v436 = vadd.f32 %v298, %v435
        %v437 = vpop.f32.mrf.mxu0
        %v438 = vadd.f32 %v302, %v437
        %439 = vmatprep.mubr.bf16.mxu0 0
        %440 = vmatmul.mubr.bf16.gmra.mxu0 %v342
        %v441 = vpop.f32.mrf.mxu0
        %v442 = vadd.f32 %v298, %v441
        %v443 = vpop.f32.mrf.mxu0
        %v444 = vadd.f32 %v302, %v443
        %v445 = vpop.f32.mrf.mxu0
        %v446 = vadd.f32 %v298, %v445
        %v447 = vpop.f32.mrf.mxu0
        %v448 = vadd.f32 %v302, %v447
        %449 = vdwg.mxu0
        %450 = vst [vmem:[#allocation2] sm:$0xff] %v379
        %451 = vst [vmem:[#allocation2 + $0x8] sm:$0xff] %v381
        %452 = vst [vmem:[#allocation2 + $0x10] sm:$0xff] %v432
        %453 = vst [vmem:[#allocation2 + $0x18] sm:$0xff] %v434
        %454 = vst [vmem:[#allocation2 + $0x20] sm:$0xff] %v383
        %455 = vst [vmem:[#allocation2 + $0x28] sm:$0xff] %v385
        %456 = vst [vmem:[#allocation2 + $0x30] sm:$0xff] %v436
        %457 = vst [vmem:[#allocation2 + $0x38] sm:$0xff] %v438
        %458 = vst [vmem:[#allocation2 + $0x40] sm:$0xff] %v389
        %459 = vst [vmem:[#allocation2 + $0x48] sm:$0xff] %v391
        %460 = vst [vmem:[#allocation2 + $0x50] sm:$0xff] %v442
        %461 = vst [vmem:[#allocation2 + $0x58] sm:$0xff] %v444
        %462 = vst [vmem:[#allocation2 + $0x60] sm:$0xff] %v393
        %463 = vst [vmem:[#allocation2 + $0x68] sm:$0xff] %v395
        %464 = vst [vmem:[#allocation2 + $0x70] sm:$0xff] %v446
        %465 = vst [vmem:[#allocation2 + $0x78] sm:$0xff] %v448
        %v466 = vld [vmem:[#allocation5] sm:$0xff]
        %v467 = vld [vmem:[#allocation5 + $0x8] sm:$0xff]
        %v468 = vld [vmem:[#allocation5 + $0x10] sm:$0xff]
        %v469 = vld [vmem:[#allocation5 + $0x18] sm:$0xff]
        %v470 = vld [vmem:[#allocation5 + $0x20] sm:$0xff]
        %v471 = vld [vmem:[#allocation5 + $0x28] sm:$0xff]
        %v472 = vld [vmem:[#allocation5 + $0x30] sm:$0xff]
        %v473 = vld [vmem:[#allocation5 + $0x38] sm:$0xff]
        %v474 = vld [vmem:[#allocation5 + $0x40] sm:$0xff]
        %v475 = vld [vmem:[#allocation5 + $0x48] sm:$0xff]
        %v476 = vld [vmem:[#allocation5 + $0x50] sm:$0xff]
        %v477 = vld [vmem:[#allocation5 + $0x58] sm:$0xff]
        %v478 = vld [vmem:[#allocation5 + $0x60] sm:$0xff]
        %v479 = vld [vmem:[#allocation5 + $0x68] sm:$0xff]
        %v480 = vld [vmem:[#allocation5 + $0x70] sm:$0xff]
        %v481 = vld [vmem:[#allocation5 + $0x78] sm:$0xff]
        %v482 = vld [vmem:[#allocation5 + $0x80] sm:$0xff]
        %v483 = vld [vmem:[#allocation5 + $0x88] sm:$0xff]
        %v484 = vld [vmem:[#allocation5 + $0x90] sm:$0xff]
        %v485 = vld [vmem:[#allocation5 + $0x98] sm:$0xff]
        %v486 = vld [vmem:[#allocation5 + $0xa0] sm:$0xff]
        %v487 = vld [vmem:[#allocation5 + $0xa8] sm:$0xff]
        %v488 = vld [vmem:[#allocation5 + $0xb0] sm:$0xff]
        %v489 = vld [vmem:[#allocation5 + $0xb8] sm:$0xff]
        %v490 = vld [vmem:[#allocation5 + $0xc0] sm:$0xff]
        %v491 = vld [vmem:[#allocation5 + $0xc8] sm:$0xff]
        %v492 = vld [vmem:[#allocation5 + $0xd0] sm:$0xff]
        %v493 = vld [vmem:[#allocation5 + $0xd8] sm:$0xff]
        %v494 = vld [vmem:[#allocation5 + $0xe0] sm:$0xff]
        %v495 = vld [vmem:[#allocation5 + $0xe8] sm:$0xff]
        %v496 = vld [vmem:[#allocation5 + $0xf0] sm:$0xff]
        %v497 = vld [vmem:[#allocation5 + $0xf8] sm:$0xff]
        %v498 = vld [vmem:[#allocation3] sm:$0xff]
        %v499 = vld [vmem:[#allocation4] sm:$0xff]
        %v500 = vld [vmem:[#allocation2] sm:$0xff]
        %v501 = vld [vmem:[#allocation2 + $0x8] sm:$0xff]
        %v502 = vld [vmem:[#allocation2 + $0x10] sm:$0xff]
        %v503 = vld [vmem:[#allocation2 + $0x18] sm:$0xff]
        %v504 = vpack.c.bf16 %v498, %v498
        %v537 = vunpack.c.l.b16 %v466
        %v538 = vunpack.c.h.b16 %v466
        %v539 = vunpack.c.l.b16 %v467
        %v540 = vunpack.c.h.b16 %v467
        %v541 = vunpack.c.l.b16 %v468
        %v542 = vunpack.c.h.b16 %v468
        %v543 = vunpack.c.l.b16 %v469
        %v544 = vunpack.c.h.b16 %v469
        %v545 = vunpack.c.l.b16 %v470
        %v546 = vunpack.c.h.b16 %v470
        %v547 = vunpack.c.l.b16 %v471
        %v548 = vunpack.c.h.b16 %v471
        %v549 = vunpack.c.l.b16 %v472
        %v550 = vunpack.c.h.b16 %v472
        %v551 = vunpack.c.l.b16 %v473
        %v552 = vunpack.c.h.b16 %v473
        %v553 = vunpack.c.l.b16 %v474
        %v554 = vunpack.c.h.b16 %v474
        %v555 = vunpack.c.l.b16 %v475
        %v556 = vunpack.c.h.b16 %v475
        %v557 = vunpack.c.l.b16 %v476
        %v558 = vunpack.c.h.b16 %v476
        %v559 = vunpack.c.l.b16 %v477
        %v560 = vunpack.c.h.b16 %v477
        %v561 = vunpack.c.l.b16 %v478
        %v562 = vunpack.c.h.b16 %v478
        %v563 = vunpack.c.l.b16 %v479
        %v564 = vunpack.c.h.b16 %v479
        %v565 = vunpack.c.l.b16 %v480
        %v566 = vunpack.c.h.b16 %v480
        %v567 = vunpack.c.l.b16 %v481
        %v568 = vunpack.c.h.b16 %v481
        %v569 = vunpack.c.l.b16 %v482
        %v570 = vunpack.c.h.b16 %v482
        %v571 = vunpack.c.l.b16 %v483
        %v572 = vunpack.c.h.b16 %v483
        %v573 = vunpack.c.l.b16 %v484
        %v574 = vunpack.c.h.b16 %v484
        %v575 = vunpack.c.l.b16 %v485
        %v576 = vunpack.c.h.b16 %v485
        %v577 = vunpack.c.l.b16 %v486
        %v578 = vunpack.c.h.b16 %v486
        %v579 = vunpack.c.l.b16 %v487
        %v580 = vunpack.c.h.b16 %v487
        %v581 = vunpack.c.l.b16 %v488
        %v582 = vunpack.c.h.b16 %v488
        %v583 = vunpack.c.l.b16 %v489
        %v584 = vunpack.c.h.b16 %v489
        %v585 = vunpack.c.l.b16 %v490
        %v586 = vunpack.c.h.b16 %v490
        %v587 = vunpack.c.l.b16 %v491
        %v588 = vunpack.c.h.b16 %v491
        %v589 = vunpack.c.l.b16 %v492
        %v590 = vunpack.c.h.b16 %v492
        %v591 = vunpack.c.l.b16 %v493
        %v592 = vunpack.c.h.b16 %v493
        %v593 = vunpack.c.l.b16 %v494
        %v594 = vunpack.c.h.b16 %v494
        %v595 = vunpack.c.l.b16 %v495
        %v596 = vunpack.c.h.b16 %v495
        %v597 = vunpack.c.l.b16 %v496
        %v598 = vunpack.c.h.b16 %v496
        %v599 = vunpack.c.l.b16 %v497
        %v600 = vunpack.c.h.b16 %v497
        %v601 = vpack.c.b16 %v541, %v537
        %v602 = vpack.c.b16 %v542, %v538
        %v603 = vpack.c.b16 %v543, %v539
        %v604 = vpack.c.b16 %v544, %v540
        %v605 = vpack.c.b16 %v549, %v545
        %v606 = vpack.c.b16 %v550, %v546
        %v607 = vpack.c.b16 %v551, %v547
        %v608 = vpack.c.b16 %v552, %v548
        %v609 = vpack.c.b16 %v557, %v553
        %v610 = vpack.c.b16 %v558, %v554
        %v611 = vpack.c.b16 %v559, %v555
        %v612 = vpack.c.b16 %v560, %v556
        %v613 = vpack.c.b16 %v565, %v561
        %v614 = vpack.c.b16 %v566, %v562
        %v615 = vpack.c.b16 %v567, %v563
        %v616 = vpack.c.b16 %v568, %v564
        %v617 = vpack.c.b16 %v573, %v569
        %v618 = vpack.c.b16 %v574, %v570
        %v619 = vpack.c.b16 %v575, %v571
        %v620 = vpack.c.b16 %v576, %v572
        %v621 = vpack.c.b16 %v581, %v577
        %v622 = vpack.c.b16 %v582, %v578
        %v623 = vpack.c.b16 %v583, %v579
        %v624 = vpack.c.b16 %v584, %v580
        %v625 = vpack.c.b16 %v589, %v585
        %v626 = vpack.c.b16 %v590, %v586
        %v627 = vpack.c.b16 %v591, %v587
        %v628 = vpack.c.b16 %v592, %v588
        %v629 = vpack.c.b16 %v597, %v593
        %v630 = vpack.c.b16 %v598, %v594
        %v631 = vpack.c.b16 %v599, %v595
        %v632 = vpack.c.b16 %v600, %v596
        %665 = vmatprep.subr.bf16.mxu0 %v630
        %666 = vmatpush1.bf16.msra.mxu0 %v629
        %667 = vmatprep.subr.bf16.mxu0 %v626
        %668 = vmatpush1.bf16.msra.mxu0 %v625
        %669 = vmatprep.subr.bf16.mxu0 %v622
        %670 = vmatpush1.bf16.msra.mxu0 %v621
        %671 = vmatprep.subr.bf16.mxu0 %v618
        %672 = vmatpush1.bf16.msra.mxu0 %v617
        %673 = vmatprep.subr.bf16.mxu0 %v614
        %674 = vmatpush1.bf16.msra.mxu0 %v613
        %675 = vmatprep.subr.bf16.mxu0 %v610
        %676 = vmatpush1.bf16.msra.mxu0 %v609
        %677 = vmatprep.subr.bf16.mxu0 %v606
        %678 = vmatpush1.bf16.msra.mxu0 %v605
        %679 = vmatprep.subr.bf16.mxu0 %v602
        %680 = vmatpush1.bf16.msra.mxu0 %v601
        %681 = vmatprep.subr.bf16.mxu0 0
        %682 = vmatpush2.bf16.msra.mxu0 0
        %683 = vmatprep.subr.bf16.mxu0 0
        %684 = vmatpush2.bf16.msra.mxu0 0
        %685 = vmatprep.subr.bf16.mxu0 0
        %686 = vmatpush2.bf16.msra.mxu0 0
        %687 = vmatprep.subr.bf16.mxu0 0
        %688 = vmatpush2.bf16.msra.mxu0 0
        %689 = vmatprep.subr.bf16.mxu0 0
        %690 = vmatpush2.bf16.msra.mxu0 0
        %691 = vmatprep.subr.bf16.mxu0 0
        %692 = vmatpush2.bf16.msra.mxu0 0
        %693 = vmatprep.subr.bf16.mxu0 0
        %694 = vmatpush2.bf16.msra.mxu0 0
        %695 = vmatprep.subr.bf16.mxu0 0
        %696 = vmatpush2.bf16.msra.mxu0 0
        %697 = vmatprep.mubr.bf16.mxu0 0
        %698 = vmatmul.mubr.bf16.gmra.mxu0 %v504
        %v699 = vpop.f32.mrf.mxu0
        %v700 = vadd.f32 0.0, %v699
        %v701 = vpop.f32.mrf.mxu0
        %v702 = vadd.f32 0.0, %v701
        %v703 = vpop.f32.mrf.mxu0
        %v704 = vpop.f32.mrf.mxu0
        %705 = vdwg.mxu0
        %706 = vmatprep.subr.bf16.mxu0 %v632
        %707 = vmatpush1.bf16.msra.mxu0 %v631
        %708 = vmatprep.subr.bf16.mxu0 %v628
        %709 = vmatpush1.bf16.msra.mxu0 %v627
        %710 = vmatprep.subr.bf16.mxu0 %v624
        %711 = vmatpush1.bf16.msra.mxu0 %v623
        %712 = vmatprep.subr.bf16.mxu0 %v620
        %713 = vmatpush1.bf16.msra.mxu0 %v619
        %714 = vmatprep.subr.bf16.mxu0 %v616
        %715 = vmatpush1.bf16.msra.mxu0 %v615
        %716 = vmatprep.subr.bf16.mxu0 %v612
        %717 = vmatpush1.bf16.msra.mxu0 %v611
        %718 = vmatprep.subr.bf16.mxu0 %v608
        %719 = vmatpush1.bf16.msra.mxu0 %v607
        %720 = vmatprep.subr.bf16.mxu0 %v604
        %721 = vmatpush1.bf16.msra.mxu0 %v603
        %722 = vmatprep.subr.bf16.mxu0 0
        %723 = vmatpush2.bf16.msra.mxu0 0
        %724 = vmatprep.subr.bf16.mxu0 0
        %725 = vmatpush2.bf16.msra.mxu0 0
        %726 = vmatprep.subr.bf16.mxu0 0
        %727 = vmatpush2.bf16.msra.mxu0 0
        %728 = vmatprep.subr.bf16.mxu0 0
        %729 = vmatpush2.bf16.msra.mxu0 0
        %730 = vmatprep.subr.bf16.mxu0 0
        %731 = vmatpush2.bf16.msra.mxu0 0
        %732 = vmatprep.subr.bf16.mxu0 0
        %733 = vmatpush2.bf16.msra.mxu0 0
        %734 = vmatprep.subr.bf16.mxu0 0
        %735 = vmatpush2.bf16.msra.mxu0 0
        %736 = vmatprep.subr.bf16.mxu0 0
        %737 = vmatpush2.bf16.msra.mxu0 0
        %738 = vmatprep.mubr.bf16.mxu0 0
        %739 = vmatmul.mubr.bf16.gmra.mxu0 %v504
        %v740 = vpop.f32.mrf.mxu0
        %v741 = vadd.f32 0.0, %v740
        %v742 = vpop.f32.mrf.mxu0
        %v743 = vadd.f32 0.0, %v742
        %v744 = vpop.f32.mrf.mxu0
        %v745 = vpop.f32.mrf.mxu0
        %746 = vdwg.mxu0
        %v747 = vadd.f32 %v500, %v700
        %v748 = vadd.f32 %v501, %v702
        %v749 = vadd.f32 %v502, %v741
        %v750 = vadd.f32 %v503, %v743
        %v751 = vxor.u32 %v747, 2147483648
        %v752 = vxor.u32 %v748, 2147483648
        %v753 = vxor.u32 %v749, 2147483648
        %v754 = vmul.f32 %v751, 1.442695
        %v755 = vpow.pop %v754
        %v756 = vmul.f32 %v752, 1.442695
        %v757 = vpow.pop %v756
        %v758 = vmul.f32 %v753, 1.442695
        %v759 = vpow.pop %v758
        %v760 = vadd.f32 %v755, 1.0
        %v761 = vadd.f32 %v757, 1.0
        %v762 = vadd.f32 %v759, 1.0
        %v763 = vrcp.pop %v760
        %v764 = vmul.f32 1.0, %v763
        %v765 = vrcp.pop %v761
        %v766 = vmul.f32 1.0, %v765
        %v767 = vrcp.pop %v762
        %v768 = vmul.f32 1.0, %v767
        %v769 = vtanh.pop %v750
        %v770 = vmul.f32 %v766, %v499
        %v771 = vmul.f32 %v764, %v769
        %v772 = vadd.f32 %v770, %v771
        %v773 = vtanh.pop %v772
        %v774 = vmul.f32 %v768, %v773
        %v775 = vld [vmem:[#allocation2 + $0x20] sm:$0xff]
        %v776 = vld [vmem:[#allocation2 + $0x28] sm:$0xff]
        %v777 = vld [vmem:[#allocation2 + $0x30] sm:$0xff]
        %v778 = vld [vmem:[#allocation2 + $0x38] sm:$0xff]
        %v779 = vpack.c.bf16 %v774, %v774
        %780 = vmatprep.subr.bf16.mxu0 %v630
        %781 = vmatpush1.bf16.msra.mxu0 %v629
        %782 = vmatprep.subr.bf16.mxu0 %v626
        %783 = vmatpush1.bf16.msra.mxu0 %v625
        %784 = vmatprep.subr.bf16.mxu0 %v622
        %785 = vmatpush1.bf16.msra.mxu0 %v621
        %786 = vmatprep.subr.bf16.mxu0 %v618
        %787 = vmatpush1.bf16.msra.mxu0 %v617
        %788 = vmatprep.subr.bf16.mxu0 %v614
        %789 = vmatpush1.bf16.msra.mxu0 %v613
        %790 = vmatprep.subr.bf16.mxu0 %v610
        %791 = vmatpush1.bf16.msra.mxu0 %v609
        %792 = vmatprep.subr.bf16.mxu0 %v606
        %793 = vmatpush1.bf16.msra.mxu0 %v605
        %794 = vmatprep.subr.bf16.mxu0 %v602
        %795 = vmatpush1.bf16.msra.mxu0 %v601
        %796 = vmatprep.subr.bf16.mxu0 0
        %797 = vmatpush2.bf16.msra.mxu0 0
        %798 = vmatprep.subr.bf16.mxu0 0
        %799 = vmatpush2.bf16.msra.mxu0 0
        %800 = vmatprep.subr.bf16.mxu0 0
        %801 = vmatpush2.bf16.msra.mxu0 0
        %802 = vmatprep.subr.bf16.mxu0 0
        %803 = vmatpush2.bf16.msra.mxu0 0
        %804 = vmatprep.subr.bf16.mxu0 0
        %805 = vmatpush2.bf16.msra.mxu0 0
        %806 = vmatprep.subr.bf16.mxu0 0
        %807 = vmatpush2.bf16.msra.mxu0 0
        %808 = vmatprep.subr.bf16.mxu0 0
        %809 = vmatpush2.bf16.msra.mxu0 0
        %810 = vmatprep.subr.bf16.mxu0 0
        %811 = vmatpush2.bf16.msra.mxu0 0
        %812 = vmatprep.mubr.bf16.mxu0 0
        %813 = vmatmul.mubr.bf16.gmra.mxu0 %v779
        %v814 = vpop.f32.mrf.mxu0
        %v815 = vadd.f32 0.0, %v814
        %v816 = vpop.f32.mrf.mxu0
        %v817 = vadd.f32 0.0, %v816
        %v818 = vpop.f32.mrf.mxu0
        %v819 = vpop.f32.mrf.mxu0
        %820 = vdwg.mxu0
        %821 = vmatprep.subr.bf16.mxu0 %v632
        %822 = vmatpush1.bf16.msra.mxu0 %v631
        %823 = vmatprep.subr.bf16.mxu0 %v628
        %824 = vmatpush1.bf16.msra.mxu0 %v627
        %825 = vmatprep.subr.bf16.mxu0 %v624
        %826 = vmatpush1.bf16.msra.mxu0 %v623
        %827 = vmatprep.subr.bf16.mxu0 %v620
        %828 = vmatpush1.bf16.msra.mxu0 %v619
        %829 = vmatprep.subr.bf16.mxu0 %v616
        %830 = vmatpush1.bf16.msra.mxu0 %v615
        %831 = vmatprep.subr.bf16.mxu0 %v612
        %832 = vmatpush1.bf16.msra.mxu0 %v611
        %833 = vmatprep.subr.bf16.mxu0 %v608
        %834 = vmatpush1.bf16.msra.mxu0 %v607
        %835 = vmatprep.subr.bf16.mxu0 %v604
        %836 = vmatpush1.bf16.msra.mxu0 %v603
        %837 = vmatprep.subr.bf16.mxu0 0
        %838 = vmatpush2.bf16.msra.mxu0 0
        %839 = vmatprep.subr.bf16.mxu0 0
        %840 = vmatpush2.bf16.msra.mxu0 0
        %841 = vmatprep.subr.bf16.mxu0 0
        %842 = vmatpush2.bf16.msra.mxu0 0
        %843 = vmatprep.subr.bf16.mxu0 0
        %844 = vmatpush2.bf16.msra.mxu0 0
        %845 = vmatprep.subr.bf16.mxu0 0
        %846 = vmatpush2.bf16.msra.mxu0 0
        %847 = vmatprep.subr.bf16.mxu0 0
        %848 = vmatpush2.bf16.msra.mxu0 0
        %849 = vmatprep.subr.bf16.mxu0 0
        %850 = vmatpush2.bf16.msra.mxu0 0
        %851 = vmatprep.subr.bf16.mxu0 0
        %852 = vmatpush2.bf16.msra.mxu0 0
        %853 = vmatprep.mubr.bf16.mxu0 0
        %854 = vmatmul.mubr.bf16.gmra.mxu0 %v779
        %v855 = vpop.f32.mrf.mxu0
        %v856 = vadd.f32 0.0, %v855
        %v857 = vpop.f32.mrf.mxu0
        %v858 = vadd.f32 0.0, %v857
        %v859 = vpop.f32.mrf.mxu0
        %v860 = vpop.f32.mrf.mxu0
        %861 = vdwg.mxu0
        %v862 = vadd.f32 %v775, %v815
        %v863 = vadd.f32 %v776, %v817
        %v864 = vadd.f32 %v777, %v856
        %v865 = vadd.f32 %v778, %v858
        %v866 = vxor.u32 %v862, 2147483648
        %v867 = vxor.u32 %v863, 2147483648
        %v868 = vxor.u32 %v864, 2147483648
        %v869 = vmul.f32 %v866, 1.442695
        %v870 = vpow.pop %v869
        %v871 = vmul.f32 %v867, 1.442695
        %v872 = vpow.pop %v871
        %v873 = vmul.f32 %v868, 1.442695
        %v874 = vpow.pop %v873
        %v875 = vadd.f32 %v870, 1.0
        %v876 = vadd.f32 %v872, 1.0
        %v877 = vadd.f32 %v874, 1.0
        %v878 = vrcp.pop %v875
        %v879 = vmul.f32 1.0, %v878
        %v880 = vrcp.pop %v876
        %v881 = vmul.f32 1.0, %v880
        %v882 = vrcp.pop %v877
        %v883 = vmul.f32 1.0, %v882
        %v884 = vtanh.pop %v865
        %v885 = vmul.f32 %v881, %v772
        %v886 = vmul.f32 %v879, %v884
        %v887 = vadd.f32 %v885, %v886
        %v888 = vtanh.pop %v887
        %v889 = vmul.f32 %v883, %v888
        %v890 = vld [vmem:[#allocation2 + $0x40] sm:$0xff]
        %v891 = vld [vmem:[#allocation2 + $0x48] sm:$0xff]
        %v892 = vld [vmem:[#allocation2 + $0x50] sm:$0xff]
        %v893 = vld [vmem:[#allocation2 + $0x58] sm:$0xff]
        %v894 = vpack.c.bf16 %v889, %v889
        %895 = vmatprep.subr.bf16.mxu0 %v630
        %896 = vmatpush1.bf16.msra.mxu0 %v629
        %897 = vmatprep.subr.bf16.mxu0 %v626
        %898 = vmatpush1.bf16.msra.mxu0 %v625
        %899 = vmatprep.subr.bf16.mxu0 %v622
        %900 = vmatpush1.bf16.msra.mxu0 %v621
        %901 = vmatprep.subr.bf16.mxu0 %v618
        %902 = vmatpush1.bf16.msra.mxu0 %v617
        %903 = vmatprep.subr.bf16.mxu0 %v614
        %904 = vmatpush1.bf16.msra.mxu0 %v613
        %905 = vmatprep.subr.bf16.mxu0 %v610
        %906 = vmatpush1.bf16.msra.mxu0 %v609
        %907 = vmatprep.subr.bf16.mxu0 %v606
        %908 = vmatpush1.bf16.msra.mxu0 %v605
        %909 = vmatprep.subr.bf16.mxu0 %v602
        %910 = vmatpush1.bf16.msra.mxu0 %v601
        %911 = vmatprep.subr.bf16.mxu0 0
        %912 = vmatpush2.bf16.msra.mxu0 0
        %913 = vmatprep.subr.bf16.mxu0 0
        %914 = vmatpush2.bf16.msra.mxu0 0
        %915 = vmatprep.subr.bf16.mxu0 0
        %916 = vmatpush2.bf16.msra.mxu0 0
        %917 = vmatprep.subr.bf16.mxu0 0
        %918 = vmatpush2.bf16.msra.mxu0 0
        %919 = vmatprep.subr.bf16.mxu0 0
        %920 = vmatpush2.bf16.msra.mxu0 0
        %921 = vmatprep.subr.bf16.mxu0 0
        %922 = vmatpush2.bf16.msra.mxu0 0
        %923 = vmatprep.subr.bf16.mxu0 0
        %924 = vmatpush2.bf16.msra.mxu0 0
        %925 = vmatprep.subr.bf16.mxu0 0
        %926 = vmatpush2.bf16.msra.mxu0 0
        %927 = vmatprep.mubr.bf16.mxu0 0
        %928 = vmatmul.mubr.bf16.gmra.mxu0 %v894
        %v929 = vpop.f32.mrf.mxu0
        %v930 = vadd.f32 0.0, %v929
        %v931 = vpop.f32.mrf.mxu0
        %v932 = vadd.f32 0.0, %v931
        %v933 = vpop.f32.mrf.mxu0
        %v934 = vpop.f32.mrf.mxu0
        %935 = vdwg.mxu0
        %936 = vmatprep.subr.bf16.mxu0 %v632
        %937 = vmatpush1.bf16.msra.mxu0 %v631
        %938 = vmatprep.subr.bf16.mxu0 %v628
        %939 = vmatpush1.bf16.msra.mxu0 %v627
        %940 = vmatprep.subr.bf16.mxu0 %v624
        %941 = vmatpush1.bf16.msra.mxu0 %v623
        %942 = vmatprep.subr.bf16.mxu0 %v620
        %943 = vmatpush1.bf16.msra.mxu0 %v619
        %944 = vmatprep.subr.bf16.mxu0 %v616
        %945 = vmatpush1.bf16.msra.mxu0 %v615
        %946 = vmatprep.subr.bf16.mxu0 %v612
        %947 = vmatpush1.bf16.msra.mxu0 %v611
        %948 = vmatprep.subr.bf16.mxu0 %v608
        %949 = vmatpush1.bf16.msra.mxu0 %v607
        %950 = vmatprep.subr.bf16.mxu0 %v604
        %951 = vmatpush1.bf16.msra.mxu0 %v603
        %952 = vmatprep.subr.bf16.mxu0 0
        %953 = vmatpush2.bf16.msra.mxu0 0
        %954 = vmatprep.subr.bf16.mxu0 0
        %955 = vmatpush2.bf16.msra.mxu0 0
        %956 = vmatprep.subr.bf16.mxu0 0
        %957 = vmatpush2.bf16.msra.mxu0 0
        %958 = vmatprep.subr.bf16.mxu0 0
        %959 = vmatpush2.bf16.msra.mxu0 0
        %960 = vmatprep.subr.bf16.mxu0 0
        %961 = vmatpush2.bf16.msra.mxu0 0
        %962 = vmatprep.subr.bf16.mxu0 0
        %963 = vmatpush2.bf16.msra.mxu0 0
        %964 = vmatprep.subr.bf16.mxu0 0
        %965 = vmatpush2.bf16.msra.mxu0 0
        %966 = vmatprep.subr.bf16.mxu0 0
        %967 = vmatpush2.bf16.msra.mxu0 0
        %968 = vmatprep.mubr.bf16.mxu0 0
        %969 = vmatmul.mubr.bf16.gmra.mxu0 %v894
        %v970 = vpop.f32.mrf.mxu0
        %v971 = vadd.f32 0.0, %v970
        %v972 = vpop.f32.mrf.mxu0
        %v973 = vadd.f32 0.0, %v972
        %v974 = vpop.f32.mrf.mxu0
        %v975 = vpop.f32.mrf.mxu0
        %976 = vdwg.mxu0
        %v977 = vadd.f32 %v890, %v930
        %v978 = vadd.f32 %v891, %v932
        %v979 = vadd.f32 %v892, %v971
        %v980 = vadd.f32 %v893, %v973
        %v981 = vxor.u32 %v977, 2147483648
        %v982 = vxor.u32 %v978, 2147483648
        %v983 = vxor.u32 %v979, 2147483648
        %v984 = vmul.f32 %v981, 1.442695
        %v985 = vpow.pop %v984
        %v986 = vmul.f32 %v982, 1.442695
        %v987 = vpow.pop %v986
        %v988 = vmul.f32 %v983, 1.442695
        %v989 = vpow.pop %v988
        %v990 = vadd.f32 %v985, 1.0
        %v991 = vadd.f32 %v987, 1.0
        %v992 = vadd.f32 %v989, 1.0
        %v993 = vrcp.pop %v990
        %v994 = vmul.f32 1.0, %v993
        %v995 = vrcp.pop %v991
        %v996 = vmul.f32 1.0, %v995
        %v997 = vrcp.pop %v992
        %v998 = vmul.f32 1.0, %v997
        %v999 = vtanh.pop %v980
        %v1000 = vmul.f32 %v996, %v887
        %v1001 = vmul.f32 %v994, %v999
        %v1002 = vadd.f32 %v1000, %v1001
        %v1003 = vtanh.pop %v1002
        %v1004 = vmul.f32 %v998, %v1003
        %v1005 = vld [vmem:[#allocation2 + $0x60] sm:$0xff]
        %v1006 = vld [vmem:[#allocation2 + $0x68] sm:$0xff]
        %v1007 = vld [vmem:[#allocation2 + $0x70] sm:$0xff]
        %v1008 = vld [vmem:[#allocation2 + $0x78] sm:$0xff]
        %v1009 = vpack.c.bf16 %v1004, %v1004
        %1010 = vmatprep.subr.bf16.mxu0 %v630
        %1011 = vmatpush1.bf16.msra.mxu0 %v629
        %1012 = vmatprep.subr.bf16.mxu0 %v626
        %1013 = vmatpush1.bf16.msra.mxu0 %v625
        %1014 = vmatprep.subr.bf16.mxu0 %v622
        %1015 = vmatpush1.bf16.msra.mxu0 %v621
        %1016 = vmatprep.subr.bf16.mxu0 %v618
        %1017 = vmatpush1.bf16.msra.mxu0 %v617
        %1018 = vmatprep.subr.bf16.mxu0 %v614
        %1019 = vmatpush1.bf16.msra.mxu0 %v613
        %1020 = vmatprep.subr.bf16.mxu0 %v610
        %1021 = vmatpush1.bf16.msra.mxu0 %v609
        %1022 = vmatprep.subr.bf16.mxu0 %v606
        %1023 = vmatpush1.bf16.msra.mxu0 %v605
        %1024 = vmatprep.subr.bf16.mxu0 %v602
        %1025 = vmatpush1.bf16.msra.mxu0 %v601
        %1026 = vmatprep.subr.bf16.mxu0 0
        %1027 = vmatpush2.bf16.msra.mxu0 0
        %1028 = vmatprep.subr.bf16.mxu0 0
        %1029 = vmatpush2.bf16.msra.mxu0 0
        %1030 = vmatprep.subr.bf16.mxu0 0
        %1031 = vmatpush2.bf16.msra.mxu0 0
        %1032 = vmatprep.subr.bf16.mxu0 0
        %1033 = vmatpush2.bf16.msra.mxu0 0
        %1034 = vmatprep.subr.bf16.mxu0 0
        %1035 = vmatpush2.bf16.msra.mxu0 0
        %1036 = vmatprep.subr.bf16.mxu0 0
        %1037 = vmatpush2.bf16.msra.mxu0 0
        %1038 = vmatprep.subr.bf16.mxu0 0
        %1039 = vmatpush2.bf16.msra.mxu0 0
        %1040 = vmatprep.subr.bf16.mxu0 0
        %1041 = vmatpush2.bf16.msra.mxu0 0
        %1042 = vmatprep.mubr.bf16.mxu0 0
        %1043 = vmatmul.mubr.bf16.gmra.mxu0 %v1009
        %v1044 = vpop.f32.mrf.mxu0
        %v1045 = vadd.f32 0.0, %v1044
        %v1046 = vpop.f32.mrf.mxu0
        %v1047 = vadd.f32 0.0, %v1046
        %v1048 = vpop.f32.mrf.mxu0
        %v1049 = vpop.f32.mrf.mxu0
        %1050 = vdwg.mxu0
        %1051 = vmatprep.subr.bf16.mxu0 %v632
        %1052 = vmatpush1.bf16.msra.mxu0 %v631
        %1053 = vmatprep.subr.bf16.mxu0 %v628
        %1054 = vmatpush1.bf16.msra.mxu0 %v627
        %1055 = vmatprep.subr.bf16.mxu0 %v624
        %1056 = vmatpush1.bf16.msra.mxu0 %v623
        %1057 = vmatprep.subr.bf16.mxu0 %v620
        %1058 = vmatpush1.bf16.msra.mxu0 %v619
        %1059 = vmatprep.subr.bf16.mxu0 %v616
        %1060 = vmatpush1.bf16.msra.mxu0 %v615
        %1061 = vmatprep.subr.bf16.mxu0 %v612
        %1062 = vmatpush1.bf16.msra.mxu0 %v611
        %1063 = vmatprep.subr.bf16.mxu0 %v608
        %1064 = vmatpush1.bf16.msra.mxu0 %v607
        %1065 = vmatprep.subr.bf16.mxu0 %v604
        %1066 = vmatpush1.bf16.msra.mxu0 %v603
        %1067 = vmatprep.subr.bf16.mxu0 0
        %1068 = vmatpush2.bf16.msra.mxu0 0
        %1069 = vmatprep.subr.bf16.mxu0 0
        %1070 = vmatpush2.bf16.msra.mxu0 0
        %1071 = vmatprep.subr.bf16.mxu0 0
        %1072 = vmatpush2.bf16.msra.mxu0 0
        %1073 = vmatprep.subr.bf16.mxu0 0
        %1074 = vmatpush2.bf16.msra.mxu0 0
        %1075 = vmatprep.subr.bf16.mxu0 0
        %1076 = vmatpush2.bf16.msra.mxu0 0
        %1077 = vmatprep.subr.bf16.mxu0 0
        %1078 = vmatpush2.bf16.msra.mxu0 0
        %1079 = vmatprep.subr.bf16.mxu0 0
        %1080 = vmatpush2.bf16.msra.mxu0 0
        %1081 = vmatprep.subr.bf16.mxu0 0
        %1082 = vmatpush2.bf16.msra.mxu0 0
        %1083 = vmatprep.mubr.bf16.mxu0 0
        %1084 = vmatmul.mubr.bf16.gmra.mxu0 %v1009
        %v1085 = vpop.f32.mrf.mxu0
        %v1086 = vadd.f32 0.0, %v1085
        %v1087 = vpop.f32.mrf.mxu0
        %v1088 = vadd.f32 0.0, %v1087
        %v1089 = vpop.f32.mrf.mxu0
        %v1090 = vpop.f32.mrf.mxu0
        %1091 = vdwg.mxu0
        %v1092 = vadd.f32 %v1005, %v1045
        %v1093 = vadd.f32 %v1006, %v1047
        %v1094 = vadd.f32 %v1007, %v1086
        %v1095 = vadd.f32 %v1008, %v1088
        %v1096 = vxor.u32 %v1092, 2147483648
        %v1097 = vxor.u32 %v1093, 2147483648
        %v1098 = vxor.u32 %v1094, 2147483648
        %v1099 = vmul.f32 %v1096, 1.442695
        %v1100 = vpow.pop %v1099
        %v1101 = vmul.f32 %v1097, 1.442695
        %v1102 = vpow.pop %v1101
        %v1103 = vmul.f32 %v1098, 1.442695
        %v1104 = vpow.pop %v1103
        %v1105 = vadd.f32 %v1100, 1.0
        %v1106 = vadd.f32 %v1102, 1.0
        %v1107 = vadd.f32 %v1104, 1.0
        %v1108 = vrcp.pop %v1105
        %v1109 = vmul.f32 1.0, %v1108
        %v1110 = vrcp.pop %v1106
        %v1111 = vmul.f32 1.0, %v1110
        %v1112 = vrcp.pop %v1107
        %v1113 = vmul.f32 1.0, %v1112
        %v1114 = vtanh.pop %v1095
        %v1115 = vmul.f32 %v1111, %v1002
        %v1116 = vmul.f32 %v1109, %v1114
        %v1117 = vadd.f32 %v1115, %v1116
        %v1118 = vtanh.pop %v1117
        %v1119 = vmul.f32 %v1113, %v1118
        %1120 = vst [vmem:[#allocation3] sm:$0xff] %v1119
        %1121 = vst [vmem:[#allocation4] sm:$0xff] %v1117
        %p1122 = scmp.eq.s32.totalorder %s20, 1
        // Predicated region
        $region57: #{tpu_custom_call.1} parent=43 // pred_check
          %p1123 = pneg %p1122
        $region58: #{tpu_custom_call.1} parent=43 // pred_check_branch
          %1125 = sbr.rel (%p1123) target = $region60
        $region59: #{tpu_custom_call.1} parent=43 // pred_region
          %v1126 = vpack.c.bf16 %v1119, %v1119
          %v1127 = vld [vmem:[#allocation8] sm:$0xf]
          %v1128 = vld [vmem:[#allocation8 + $0x4] sm:$0xf]
          %v1129 = vld [vmem:[#allocation8 + $0x8] sm:$0xf]
          %v1130 = vld [vmem:[#allocation8 + $0xc] sm:$0xf]
          %v1131 = vld [vmem:[#allocation8 + $0x10] sm:$0xf]
          %v1132 = vld [vmem:[#allocation8 + $0x14] sm:$0xf]
          %v1133 = vld [vmem:[#allocation8 + $0x18] sm:$0xf]
          %v1134 = vld [vmem:[#allocation8 + $0x1c] sm:$0xf]
          %v1135 = vld [vmem:[#allocation8 + $0x20] sm:$0xf]
          %v1136 = vld [vmem:[#allocation8 + $0x24] sm:$0xf]
          %v1137 = vld [vmem:[#allocation8 + $0x28] sm:$0xf]
          %v1138 = vld [vmem:[#allocation8 + $0x2c] sm:$0xf]
          %v1139 = vld [vmem:[#allocation8 + $0x30] sm:$0xf]
          %v1140 = vld [vmem:[#allocation8 + $0x34] sm:$0xf]
          %v1141 = vld [vmem:[#allocation8 + $0x38] sm:$0xf]
          %v1142 = vld [vmem:[#allocation8 + $0x3c] sm:$0xf]
          %v1143 = vld [vmem:[%s5] sm:$0x1]
          %v1145 = vlaneseq
          %v1146 = vshrl.u32 %v1145, 7
          %v1147 = vsub.s32 0, %v1146
          %v1148 = vrot.slane %v1143, %v1147
          %v1166 = vunpack.c.l.b16 %v1127
          %v1167 = vunpack.c.l.b16 %v1128
          %v1168 = vunpack.c.l.b16 %v1129
          %v1169 = vunpack.c.l.b16 %v1130
          %v1170 = vunpack.c.l.b16 %v1131
          %v1171 = vunpack.c.l.b16 %v1132
          %v1172 = vunpack.c.l.b16 %v1133
          %v1173 = vunpack.c.l.b16 %v1134
          %v1174 = vunpack.c.l.b16 %v1135
          %v1175 = vunpack.c.l.b16 %v1136
          %v1176 = vunpack.c.l.b16 %v1137
          %v1177 = vunpack.c.l.b16 %v1138
          %v1178 = vunpack.c.l.b16 %v1139
          %v1179 = vunpack.c.l.b16 %v1140
          %v1180 = vunpack.c.l.b16 %v1141
          %v1181 = vunpack.c.l.b16 %v1142
          %v1182 = vpack.c.b16 %v1167, %v1166
          %v1183 = vpack.c.b16 %v1169, %v1168
          %v1184 = vpack.c.b16 %v1171, %v1170
          %v1185 = vpack.c.b16 %v1173, %v1172
          %v1186 = vpack.c.b16 %v1175, %v1174
          %v1187 = vpack.c.b16 %v1177, %v1176
          %v1188 = vpack.c.b16 %v1179, %v1178
          %v1189 = vpack.c.b16 %v1181, %v1180
          %1198 = vmatprep.subr.bf16.mxu0 0
          %1199 = vmatpush1.bf16.msra.mxu0 %v1189
          %1200 = vmatprep.subr.bf16.mxu0 0
          %1201 = vmatpush1.bf16.msra.mxu0 %v1188
          %1202 = vmatprep.subr.bf16.mxu0 0
          %1203 = vmatpush1.bf16.msra.mxu0 %v1187
          %1204 = vmatprep.subr.bf16.mxu0 0
          %1205 = vmatpush1.bf16.msra.mxu0 %v1186
          %1206 = vmatprep.subr.bf16.mxu0 0
          %1207 = vmatpush1.bf16.msra.mxu0 %v1185
          %1208 = vmatprep.subr.bf16.mxu0 0
          %1209 = vmatpush1.bf16.msra.mxu0 %v1184
          %1210 = vmatprep.subr.bf16.mxu0 0
          %1211 = vmatpush1.bf16.msra.mxu0 %v1183
          %1212 = vmatprep.subr.bf16.mxu0 0
          %1213 = vmatpush1.bf16.msra.mxu0 %v1182
          %1214 = vmatprep.subr.bf16.mxu0 0
          %1215 = vmatpush2.bf16.msra.mxu0 0
          %1216 = vmatprep.subr.bf16.mxu0 0
          %1217 = vmatpush2.bf16.msra.mxu0 0
          %1218 = vmatprep.subr.bf16.mxu0 0
          %1219 = vmatpush2.bf16.msra.mxu0 0
          %1220 = vmatprep.subr.bf16.mxu0 0
          %1221 = vmatpush2.bf16.msra.mxu0 0
          %1222 = vmatprep.subr.bf16.mxu0 0
          %1223 = vmatpush2.bf16.msra.mxu0 0
          %1224 = vmatprep.subr.bf16.mxu0 0
          %1225 = vmatpush2.bf16.msra.mxu0 0
          %1226 = vmatprep.subr.bf16.mxu0 0
          %1227 = vmatpush2.bf16.msra.mxu0 0
          %1228 = vmatprep.subr.bf16.mxu0 0
          %1229 = vmatpush2.bf16.msra.mxu0 0
          %1230 = vmatprep.mubr.bf16.mxu0 0
          %1231 = vmatmul.mubr.bf16.gmra.mxu0 %v1126
          %v1232 = vpop.f32.mrf.mxu0
          %v1233 = vadd.f32 %v1148, %v1232
          %v1234 = vpop.f32.mrf.mxu0
          %v1235 = vpop.f32.mrf.mxu0
          %v1236 = vpop.f32.mrf.mxu0
          %1237 = vdwg.mxu0
          %1238 = vst [vmem:[#allocation10] sm:$0xff] %v1233
        $region60: #{tpu_custom_call.1} parent=43 // pred_fallthru
          _
        // Predicated region
        $region61: #{tpu_custom_call.1} parent=43 // pred_check
          %p1239 = pneg %p164
        $region62: #{tpu_custom_call.1} parent=43 // pred_check_branch
          %1241 = sbr.rel (%p1239) target = $region64
        $region63: #{tpu_custom_call.1} parent=43 // pred_region
          %s1243 = ssub.s32 128, 128
          %1244 = vsyncadd [#allocation7], %s1243
          %s1246 = sshll.u32 [#allocation10], 4
          %s1247 = int_to_ptr.vmem [resolvable:$true] %s1246
          %1249 = dma.vmem_to_hbm [thread:$0]  %s1247, 128, %s6, [#allocation7]
        $region64: #{tpu_custom_call.1} parent=43 // pred_fallthru
          _
        // Predicated region
        $region65: #{tpu_custom_call.1} parent=43 // pred_check
          %p1250 = pneg %p164
        $region66: #{tpu_custom_call.1} parent=43 // pred_check_branch
          %1252 = sbr.rel (%p1250) target = $region68
        $region67: #{tpu_custom_call.1} parent=43 // pred_region
          %1253 = dma.done [#allocation7], 128
        $region68: #{tpu_custom_call.1} parent=43 // pred_fallthru
          _
      $region44: #{tpu_custom_call.1} parent=5 // pred_fallthru
        _
      %p1254 = scmp.le.s32.totalorder 2, %s15
      // Predicated region
      $region69: #{tpu_custom_call.1} parent=5 // pred_check
        %p1255 = pneg %p1254
      $region70: #{tpu_custom_call.1} parent=5 // pred_check_branch
        %1257 = sbr.rel (%p1255) target = $region72
      $region71: #{tpu_custom_call.1} parent=5 // pred_region
        %s1258 = ssub.s32 %s15, 2
      $region72: #{tpu_custom_call.1} parent=5 // pred_fallthru
        _
    $region6: #{tpu_custom_call.1} parent=1 // loop_footer
      %s19 = sadd.s32 1, %s15
    $region7: #{tpu_custom_call.1} parent=1 // loop_footer_branch
      %14 = sbr.rel target = $region3
    $region8: #{tpu_custom_call.1} parent=1 // loop_exit
      _
    %1259 = vsyncpa [#allocation6], 1
    %s1260 = scalar_lea.sflag [#allocation6], 1
    %1261 = vsyncpa %s1260, 1
    %1262 = vsyncpa [#allocation9], 1
    %1263 = vsyncpa [#allocation7], 1
    %s1264 = scalar_lea.sflag [#allocation7], 1
    %1265 = vsyncpa %s1264, 1

</llo_original>
